<compile_context>
chip_gen: v7x
topology: tpu7x:2x2x1
jax: 0.10.0
libtpu: 0.0.40
codegen_flags: <defaults>
</compile_context>

<pallas_src>
import functools

import numpy as np
import jax
import jax.numpy as jnp
from jax import lax
from jax.experimental import pallas as pl
from jax.experimental.pallas import tpu as pltpu

_LOSS_LANES = 128
_E_CAP = 32                              # v6e: large VMEM -> big episode blocks
_E_VMEM_BUDGET = 16 * 1024 * 1024        # per-block working-set target (v7x-safe)
_VMEM_LIMIT_BYTES = 48 * 1024 * 1024     # < v7x 64 MiB physical, > default scoped


def _maml_block_kernel(xs_ref, y1h_ref, xq_ref,
                       we_ref, be_ref, wc_ref, bc_ref,
                       logits_ref, loss_ref, *,
                       n_step, n_way, encoder_lr, classifier_lr,
                       weight_decay, momentum):
    """One grid step == E episodes: inner-loop adaptation + query forward."""
    E, S, Dp = xs_ref.shape
    Hp = we_ref.shape[1]
    Wp = wc_ref.shape[1]
    LPAD, LANES = loss_ref.shape[1], loss_ref.shape[2]

    xs_bf = xs_ref[...].astype(jnp.bfloat16)     # (E, S, Dp) loop-invariant
    y1h = y1h_ref[...]                           # (E, S, Wp) one-hot labels

    # per-episode copies of the shared meta-initialized parameters (they
    # diverge per episode over the inner loop, so materialize per episode)
    we0 = jnp.broadcast_to(we_ref[...], (E, Dp, Hp))
    be0 = jnp.broadcast_to(be_ref[...], (E, 1, Hp))
    wc0 = jnp.broadcast_to(wc_ref[...], (E, Hp, Wp))
    bc0 = jnp.broadcast_to(bc_ref[...], (E, 1, Wp))

    use_mom = momentum > 0.0
    use_wd = weight_decay > 0.0
    mask_classes = n_way < Wp

    inv_n = jnp.float32(1.0 / S)
    elr = jnp.float32(encoder_lr)
    clr = jnp.float32(classifier_lr)
    wd = jnp.float32(weight_decay)
    mom = jnp.float32(momentum)

    if mask_classes:   # tiny (1,1,Wp) mask, broadcast inside jnp.where
        valid = lax.broadcasted_iota(jnp.int32, (1, 1, Wp), 2) < n_way

    def fused_update(w, g, m, lr):
        """grad + weight decay + momentum + SGD in one fused elementwise pass."""
        if use_wd:
            g = g + wd * w
        if use_mom:
            g = g + mom * m          # grad = grad + momentum * buf
            return w - lr * g, g     # buf = grad
        return w - lr * g, None

    def inner_step(step, carry):
        we, be, wc, bc, moms, loss_acc = carry
        mwe, mbe, mwc, mbc = moms

        # bf16 shadows cast ONCE per step (MXU operands), f32 elsewhere
        we_bf = we.astype(jnp.bfloat16)
        wc_bf = wc.astype(jnp.bfloat16)

        # ---- inner forward (support set) ----
        pre = jnp.einsum('esd,edh->esh', xs_bf, we_bf,
                         preferred_element_type=jnp.float32) + be
        feat = jnp.maximum(pre, 0.0)
        feat_bf = feat.astype(jnp.bfloat16)
        logits = jnp.einsum('esh,ehw->esw', feat_bf, wc_bf,
                            preferred_element_type=jnp.float32) + bc
        if mask_classes:
            logits = jnp.where(valid, logits, jnp.float32(-1e30))

        # ---- cross entropy (mean over support set), exact softmax ----
        m = jnp.max(logits, axis=-1, keepdims=True)
        z = logits - m
        se = jnp.sum(jnp.exp(z), axis=-1, keepdims=True)
        logp = z - jnp.log(se)
        p = jnp.exp(logp)                                   # exact probabilities
        loss_e = jnp.sum(jnp.sum(-(y1h * logp), axis=2, keepdims=True),
                         axis=1, keepdims=True) * inv_n      # (E, 1, 1)
        step_mask = lax.broadcasted_iota(jnp.int32, (1, LPAD, LANES), 1) == step
        loss_acc = loss_acc + jnp.where(step_mask, loss_e, 0.0)

        # ---- manual backward (autograd.grad equivalent) ----
        dlogits = (p - y1h) * inv_n                          # (E, S, Wp)
        dlogits_bf = dlogits.astype(jnp.bfloat16)
        gwc = jnp.einsum('esh,esw->ehw', feat_bf, dlogits_bf,
                         preferred_element_type=jnp.float32)  # (E, Hp, Wp)
        gbc = jnp.sum(dlogits, axis=1, keepdims=True)         # (E, 1, Wp)
        dfeat = jnp.einsum('esw,ehw->esh', dlogits_bf, wc_bf,
                           preferred_element_type=jnp.float32)  # (E, S, Hp)
        dpre = jnp.where(pre > 0.0, dfeat, 0.0)
        dpre_bf = dpre.astype(jnp.bfloat16)
        gwe = jnp.einsum('esd,esh->edh', xs_bf, dpre_bf,       # contract over S
                         preferred_element_type=jnp.float32)   # (E, Dp, Hp)
        gbe = jnp.sum(dpre, axis=1, keepdims=True)             # (E, 1, Hp)

        # ---- fused weight-decay + momentum + SGD update ----
        we, mwe = fused_update(we, gwe, mwe, elr)
        be, mbe = fused_update(be, gbe, mbe, elr)
        wc, mwc = fused_update(wc, gwc, mwc, clr)
        bc, mbc = fused_update(bc, gbc, mbc, clr)
        return (we, be, wc, bc, (mwe, mbe, mwc, mbc), loss_acc)

    if use_mom:
        moms0 = (jnp.zeros_like(we0), jnp.zeros_like(be0),
                 jnp.zeros_like(wc0), jnp.zeros_like(bc0))
    else:
        moms0 = (None, None, None, None)
    loss0 = jnp.zeros((E, LPAD, LANES), jnp.float32)
    carry = (we0, be0, wc0, bc0, moms0, loss0)

    if n_step <= 2:      # short trip counts: static unroll is cheaper
        for s in range(n_step):
            carry = inner_step(s, carry)
    else:                # bound live ranges per iteration (no unrolled spills)
        carry = lax.fori_loop(0, n_step, inner_step, carry)

    we, be, wc, bc, _, loss_acc = carry

    # ---- query forward with the adapted parameters ----
    xq_bf = xq_ref[...].astype(jnp.bfloat16)
    we_bf = we.astype(jnp.bfloat16)
    wc_bf = wc.astype(jnp.bfloat16)
    featq = jnp.maximum(
        jnp.einsum('eqd,edh->eqh', xq_bf, we_bf,
                   preferred_element_type=jnp.float32) + be, 0.0)
    logits_ref[...] = jnp.einsum('eqh,ehw->eqw', featq.astype(jnp.bfloat16),
                                 wc_bf, preferred_element_type=jnp.float32) + bc
    loss_ref[...] = loss_acc        # single unmasked store of all step losses


def _round_up(x, m):
    return ((x + m - 1) // m) * m


def _pad_axis(a, axis, target):
    cur = a.shape[axis]
    if cur == target:
        return a
    pads = [(0, 0)] * a.ndim
    pads[axis] = (0, target - cur)
    return jnp.pad(a, pads)


def _per_episode_vmem_bytes(Dp, Hp, Wp, S, Q, momentum):
    """Rough per-episode working-set estimate used to size the episode block."""
    wsz = Dp * Hp + Hp * Wp + Hp + Wp
    f32_copies = 2 + (1 if momentum > 0 else 0)   # carried params + grads (+ mom)
    acts = 3 * S * Hp + 3 * S * Wp + Q * Hp + Q * Wp
    ins = 2 * (S * Dp + S * Wp + Q * Dp)          # double-buffered inputs
    bf16 = wsz + S * Dp                           # bf16 shadows
    return 4 * (f32_copies * wsz + acts + ins) + 2 * bf16


def _choose_episode_block(n_ep, per_ep_bytes):
    e = max(1, min(_E_CAP, _E_VMEM_BUDGET // max(per_ep_bytes, 1)))
    if n_ep >= 2:
        e = min(e, n_ep // 2)    # >= 2 grid blocks so both v7x TensorCores run
    return int(max(1, min(e, n_ep)))


def maml_forward(x_shot, x_query, y_shot, enc_w, enc_b, cls_w, cls_b, inner_args):
    """Mirrors MAML.forward: returns (logits, sotl, per-step losses)."""
    n_ep, n_sup = x_shot.shape[0], x_shot.shape[1]
    n_qry = x_query.shape[1]
    D = int(np.prod(x_shot.shape[2:]))
    hid = enc_w.shape[1]
    n_way = cls_w.shape[1]
    n_step = int(inner_args['n_step'])

    Dp = _round_up(D, 128)
    Hp = _round_up(hid, 128)
    Wp = _round_up(n_way, 128)
    LPAD = _round_up(max(n_step, 1), 8)

    # flatten NCHW -> features (same element order as torch x.view(N, -1)),
    # then zero-pad the feature / hidden / class axes to lane-dense widths.
    xs = _pad_axis(x_shot.reshape(n_ep, n_sup, D).astype(jnp.float32), 2, Dp)
    xq = _pad_axis(x_query.reshape(n_ep, n_qry, D).astype(jnp.float32), 2, Dp)
    y1h = jax.nn.one_hot(y_shot, Wp, dtype=jnp.float32)

    we = _pad_axis(_pad_axis(enc_w.astype(jnp.float32), 0, Dp), 1, Hp)
    be = _pad_axis(enc_b.astype(jnp.float32).reshape(1, hid), 1, Hp)
    wc = _pad_axis(_pad_axis(cls_w.astype(jnp.float32), 0, Hp), 1, Wp)
    bc = _pad_axis(cls_b.astype(jnp.float32).reshape(1, n_way), 1, Wp)

    momentum = float(inner_args['momentum'])
    per_ep = _per_episode_vmem_bytes(Dp, Hp, Wp, n_sup, n_qry, momentum)
    E = _choose_episode_block(n_ep, per_ep)
    n_ep_pad = _round_up(n_ep, E)
    if n_ep_pad > n_ep:            # dummy episodes; outputs sliced off below
        xs = _pad_axis(xs, 0, n_ep_pad)
        xq = _pad_axis(xq, 0, n_ep_pad)
        y1h = _pad_axis(y1h, 0, n_ep_pad)
    n_blk = n_ep_pad // E

    kernel = functools.partial(
        _maml_block_kernel,
        n_step=n_step, n_way=n_way,
        encoder_lr=float(inner_args['encoder_lr']),
        classifier_lr=float(inner_args['classifier_lr']),
        weight_decay=float(inner_args['weight_decay']),
        momentum=momentum,
    )

    grid_spec = pltpu.PrefetchScalarGridSpec(
        num_scalar_prefetch=0,
        grid=(n_blk,),
        in_specs=[
            pl.BlockSpec((E, n_sup, Dp), lambda g: (g, 0, 0)),       # xs
            pl.BlockSpec((E, n_sup, Wp), lambda g: (g, 0, 0)),       # one-hot y
            pl.BlockSpec((E, n_qry, Dp), lambda g: (g, 0, 0)),       # xq
            pl.BlockSpec((Dp, Hp), lambda g: (0, 0)),                # enc weight
            pl.BlockSpec((1, Hp), lambda g: (0, 0)),                 # enc bias
            pl.BlockSpec((Hp, Wp), lambda g: (0, 0)),                # cls weight
            pl.BlockSpec((1, Wp), lambda g: (0, 0)),                 # cls bias
        ],
        out_specs=[
            pl.BlockSpec((E, n_qry, Wp), lambda g: (g, 0, 0)),          # logits
            pl.BlockSpec((E, LPAD, _LOSS_LANES), lambda g: (g, 0, 0)),  # losses
        ],
    )

    logits_pad, losses_wide = pl.pallas_call(
        kernel,
        grid_spec=grid_spec,
        out_shape=(
            jax.ShapeDtypeStruct((n_ep_pad, n_qry, Wp), jnp.float32),
            jax.ShapeDtypeStruct((n_ep_pad, LPAD, _LOSS_LANES), jnp.float32),
        ),
        compiler_params=pltpu.CompilerParams(
            dimension_semantics=("parallel",),
            vmem_limit_bytes=_VMEM_LIMIT_BYTES),
    )(xs, y1h, xq, we, be, wc, bc)

    logits = logits_pad[:n_ep, :, :n_way]    # drop dummy episodes / padded lanes
    losses = losses_wide[:n_ep, :n_step, 0]  # [n_episode, n_step]
    sotl = jnp.sum(losses)                   # sum-over-training-losses
    return logits, sotl, losses


def _reference(x_shot, x_query, y_shot, enc_w, enc_b, cls_w, cls_b, inner_args):
    """Pure-JAX (f32, unpadded) reference reproducing the MAML inner loop."""
    n_ep, n_sup = x_shot.shape[0], x_shot.shape[1]
    n_qry = x_query.shape[1]
    D, _ = enc_w.shape
    n_way = cls_w.shape[1]
    xs_all = x_shot.reshape(n_ep, n_sup, D).astype(jnp.float32)
    xq_all = x_query.reshape(n_ep, n_qry, D).astype(jnp.float32)
    wd = inner_args['weight_decay']
    mom = inner_args['momentum']
    elr = inner_args['encoder_lr']
    clr = inner_args['classifier_lr']

    all_logits, all_losses = [], []
    for ep in range(n_ep):
        xs, xq = xs_all[ep], xq_all[ep]
        y1h = jax.nn.one_hot(y_shot[ep], n_way, dtype=jnp.float32)
        we, be, wc, bc = enc_w, enc_b, cls_w, cls_b
        mwe = jnp.zeros_like(we); mbe = jnp.zeros_like(be)
        mwc = jnp.zeros_like(wc); mbc = jnp.zeros_like(bc)
        losses = []
        for _ in range(inner_args['n_step']):
            pre = xs @ we + be
            feat = jnp.maximum(pre, 0.0)
            logits = feat @ wc + bc
            logp = jax.nn.log_softmax(logits, axis=-1)
            loss = -jnp.mean(jnp.sum(y1h * logp, axis=-1))
            losses.append(loss)
            dlogits = (jax.nn.softmax(logits, -1) - y1h) / n_sup
            gwc = feat.T @ dlogits
            gbc = jnp.sum(dlogits, 0, keepdims=True)
            dpre = jnp.where(pre > 0, dlogits @ wc.T, 0.0)
            gwe = xs.T @ dpre
            gbe = jnp.sum(dpre, 0, keepdims=True)
            gwe += wd * we; gbe += wd * be; gwc += wd * wc; gbc += wd * bc
            gwe = gwe + mom * mwe; mwe = gwe
            gbe = gbe + mom * mbe; mbe = gbe
            gwc = gwc + mom * mwc; mwc = gwc
            gbc = gbc + mom * mbc; mbc = gbc
            we = we - elr * gwe; be = be - elr * gbe
            wc = wc - clr * gwc; bc = bc - clr * gbc
        featq = jnp.maximum(xq @ we + be, 0.0)
        all_logits.append(featq @ wc + bc)
        all_losses.append(jnp.stack(losses))
    return jnp.stack(all_logits), jnp.stack(all_losses)


if __name__ == "__main__":
    key = jax.random.PRNGKey(0)
    n_episode, n_way, n_shot, n_query_per = 2, 4, 2, 2
    C, H, W = 4, 8, 8
    HID = 32
    D = C * H * W
    n_sup = n_way * n_shot
    n_qry = n_way * n_query_per

    k0, k1, k2, k3 = jax.random.split(key, 4)
    x_shot = jax.random.normal(k0, (n_episode, n_sup, C, H, W), jnp.float32)
    x_query = jax.random.normal(k1, (n_episode, n_qry, C, H, W), jnp.float32)
    y_one_ep = jnp.repeat(jnp.arange(n_way, dtype=jnp.int32), n_shot)
    y_shot = jnp.tile(y_one_ep[None, :], (n_episode, 1))

    # deterministic parameter init (encoder: D->HID, classifier: HID->n_way)
    enc_w = 0.1 * jax.random.normal(k2, (D, HID), jnp.float32)
    enc_b = jnp.zeros((1, HID), jnp.float32)
    cls_w = 0.1 * jax.random.normal(k3, (HID, n_way), jnp.float32)
    cls_b = jnp.zeros((1, n_way), jnp.float32)

    inner_args = dict(n_step=3, encoder_lr=0.01, classifier_lr=0.05,
                      weight_decay=5e-4, momentum=0.9,
                      first_order=True, frozen=[])

    logits, sotl, losses = maml_forward(
        x_shot, x_query, y_shot, enc_w, enc_b, cls_w, cls_b, inner_args)
    logits = jax.block_until_ready(logits)
    sotl = jax.block_until_ready(sotl)
    losses = jax.block_until_ready(losses)

    assert logits.shape == (n_episode, n_qry, n_way)
    assert losses.shape == (n_episode, inner_args['n_step'])
    assert bool(jnp.all(jnp.isfinite(logits))) and bool(jnp.isfinite(sotl))

    ref_logits, ref_losses = _reference(
        x_shot, x_query, y_shot, enc_w, enc_b, cls_w, cls_b, inner_args)
    np.testing.assert_allclose(np.asarray(logits), np.asarray(ref_logits),
                               rtol=5e-2, atol=5e-2)
    np.testing.assert_allclose(np.asarray(losses), np.asarray(ref_losses),
                               rtol=5e-2, atol=5e-2)

    print("KERNEL_OK")
</pallas_src>

<mosaic_0001>
module attributes {stable_mosaic.version = 11 : i64} {
  func.func @_maml_block_kernel(%arg0: i32, %arg1: memref<1x8x256xf32, #tpu.memory_space<vmem>>, %arg2: memref<1x8x128xf32, #tpu.memory_space<vmem>>, %arg3: memref<1x8x256xf32, #tpu.memory_space<vmem>>, %arg4: memref<256x128xf32, #tpu.memory_space<vmem>>, %arg5: memref<1x128xf32, #tpu.memory_space<vmem>>, %arg6: memref<128x128xf32, #tpu.memory_space<vmem>>, %arg7: memref<1x128xf32, #tpu.memory_space<vmem>>, %arg8: memref<1x8x128xf32, #tpu.memory_space<vmem>>, %arg9: memref<1x8x128xf32, #tpu.memory_space<vmem>>) attributes {dimension_semantics = [#tpu.dimension_semantics<parallel>], iteration_bounds = array<i64: 2>, scalar_prefetch = 0 : i64, scratch_operands = 0 : i64, tpu.core_type = #tpu.core_type<tc>, window_params = [{transform_indices = @transform_0, window_bounds = array<i64: 1, 8, 256>}, {transform_indices = @transform_1, window_bounds = array<i64: 1, 8, 128>}, {transform_indices = @transform_2, window_bounds = array<i64: 1, 8, 256>}, {pipeline_mode = #tpu.pipeline_mode<synchronous>, transform_indices = @transform_3, window_bounds = array<i64: 256, 128>}, {pipeline_mode = #tpu.pipeline_mode<synchronous>, transform_indices = @transform_4, window_bounds = array<i64: 1, 128>}, {pipeline_mode = #tpu.pipeline_mode<synchronous>, transform_indices = @transform_5, window_bounds = array<i64: 128, 128>}, {pipeline_mode = #tpu.pipeline_mode<synchronous>, transform_indices = @transform_6, window_bounds = array<i64: 1, 128>}, {transform_indices = @transform_7, window_bounds = array<i64: 1, 8, 128>}, {transform_indices = @transform_8, window_bounds = array<i64: 1, 8, 128>}]} {
    %c0 = arith.constant 0 : index
    %c0_0 = arith.constant 0 : index
    %c0_1 = arith.constant 0 : index
    %0 = vector.load %arg1[%c0, %c0_0, %c0_1] : memref<1x8x256xf32, #tpu.memory_space<vmem>>, vector<1x8x256xf32>
    %1 = arith.truncf %0 : vector<1x8x256xf32> to vector<1x8x256xbf16>
    %c0_2 = arith.constant 0 : index
    %c0_3 = arith.constant 0 : index
    %c0_4 = arith.constant 0 : index
    %2 = vector.load %arg2[%c0_2, %c0_3, %c0_4] : memref<1x8x128xf32, #tpu.memory_space<vmem>>, vector<1x8x128xf32>
    %c0_5 = arith.constant 0 : index
    %c0_6 = arith.constant 0 : index
    %3 = vector.load %arg4[%c0_5, %c0_6] : memref<256x128xf32, #tpu.memory_space<vmem>>, vector<256x128xf32>
    %4 = vector.shape_cast %3 : vector<256x128xf32> to vector<1x256x128xf32>
    %c0_7 = arith.constant 0 : index
    %c0_8 = arith.constant 0 : index
    %5 = vector.load %arg5[%c0_7, %c0_8] : memref<1x128xf32, #tpu.memory_space<vmem>>, vector<1x128xf32>
    %6 = vector.shape_cast %5 : vector<1x128xf32> to vector<1x1x128xf32>
    %c0_9 = arith.constant 0 : index
    %c0_10 = arith.constant 0 : index
    %7 = vector.load %arg6[%c0_9, %c0_10] : memref<128x128xf32, #tpu.memory_space<vmem>>, vector<128x128xf32>
    %8 = vector.shape_cast %7 : vector<128x128xf32> to vector<1x128x128xf32>
    %c0_11 = arith.constant 0 : index
    %c0_12 = arith.constant 0 : index
    %9 = vector.load %arg7[%c0_11, %c0_12] : memref<1x128xf32, #tpu.memory_space<vmem>>, vector<1x128xf32>
    %10 = vector.shape_cast %9 : vector<1x128xf32> to vector<1x1x128xf32>
    %11 = tpu.iota {dimensions = array<i32: 2>} : vector<1x1x128xi32>
    %c4_i32 = arith.constant 4 : i32
    %12 = vector.broadcast %c4_i32 : i32 to vector<1x1x128xi32>
    %13 = arith.cmpi slt, %11, %12 : vector<1x1x128xi32>
    %cst = arith.constant 0.000000e+00 : f32
    %14 = vector.broadcast %cst : f32 to vector<1x256x128xf32>
    %cst_13 = arith.constant 0.000000e+00 : f32
    %15 = vector.broadcast %cst_13 : f32 to vector<1x1x128xf32>
    %cst_14 = arith.constant 0.000000e+00 : f32
    %16 = vector.broadcast %cst_14 : f32 to vector<1x128x128xf32>
    %cst_15 = arith.constant 0.000000e+00 : f32
    %17 = vector.broadcast %cst_15 : f32 to vector<1x1x128xf32>
    %cst_16 = arith.constant 0.000000e+00 : f32
    %18 = vector.broadcast %cst_16 : f32 to vector<1x8x128xf32>
    %cst_17 = arith.constant 1.250000e-01 : f32
    %cst_18 = arith.constant 5.000000e-04 : f32
    %cst_19 = arith.constant 0.899999976 : f32
    %cst_20 = arith.constant 0.00999999977 : f32
    %cst_21 = arith.constant 5.000000e-02 : f32
    %c0_i32 = arith.constant 0 : i32
    %c3_i32 = arith.constant 3 : i32
    %19 = arith.addi %c0_i32, %c3_i32 : i32
    %c1_i32 = arith.constant 1 : i32
    %20:9 = scf.for %arg10 = %c0_i32 to %19 step %c1_i32 iter_args(%arg11 = %4, %arg12 = %6, %arg13 = %8, %arg14 = %10, %arg15 = %14, %arg16 = %15, %arg17 = %16, %arg18 = %17, %arg19 = %18) -> (vector<1x256x128xf32>, vector<1x1x128xf32>, vector<1x128x128xf32>, vector<1x1x128xf32>, vector<1x256x128xf32>, vector<1x1x128xf32>, vector<1x128x128xf32>, vector<1x1x128xf32>, vector<1x8x128xf32>)  : i32 {
      %36 = arith.truncf %arg11 : vector<1x256x128xf32> to vector<1x256x128xbf16>
      %37 = arith.truncf %arg13 : vector<1x128x128xf32> to vector<1x128x128xbf16>
      "tpu.trace_start"() <{level = 10 : i32, message = "esd,edh->esh"}> : () -> ()
      %cst_35 = arith.constant dense<0.000000e+00> : vector<1x8x128xf32>
      %38 = tpu.matmul %1, %36, %cst_35 {dimension_numbers = #tpu.dot_dimension_numbers<[2], [1], [1], [2], [0, 0, 0, 1, 1, 2], [0], [0]>} : vector<1x8x256xbf16>, vector<1x256x128xbf16>, vector<1x8x128xf32> -> vector<1x8x128xf32>
      "tpu.trace_stop"() : () -> ()
      %39 = vector.broadcast %arg12 : vector<1x1x128xf32> to vector<1x8x128xf32>
      %40 = arith.addf %38, %39 : vector<1x8x128xf32>
      %cst_36 = arith.constant 0.000000e+00 : f32
      %41 = vector.broadcast %cst_36 : f32 to vector<1x8x128xf32>
      %42 = arith.maximumf %40, %41 : vector<1x8x128xf32>
      %43 = arith.truncf %42 : vector<1x8x128xf32> to vector<1x8x128xbf16>
      "tpu.trace_start"() <{level = 10 : i32, message = "esh,ehw->esw"}> : () -> ()
      %cst_37 = arith.constant dense<0.000000e+00> : vector<1x8x128xf32>
      %44 = tpu.matmul %43, %37, %cst_37 {dimension_numbers = #tpu.dot_dimension_numbers<[2], [1], [1], [2], [0, 0, 0, 1, 1, 2], [0], [0]>} : vector<1x8x128xbf16>, vector<1x128x128xbf16>, vector<1x8x128xf32> -> vector<1x8x128xf32>
      "tpu.trace_stop"() : () -> ()
      %45 = vector.broadcast %arg14 : vector<1x1x128xf32> to vector<1x8x128xf32>
      %46 = arith.addf %44, %45 : vector<1x8x128xf32>
      %cst_38 = arith.constant -1.000000e+30 : f32
      %47 = vector.shape_cast %13 : vector<1x1x128xi1> to vector<1x1x128xi1>
      %48 = vector.broadcast %47 : vector<1x1x128xi1> to vector<1x8x128xi1>
      %49 = vector.broadcast %cst_38 : f32 to vector<1x8x128xf32>
      %50 = arith.select %48, %46, %49 : vector<1x8x128xi1>, vector<1x8x128xf32>
      %cst_39 = arith.constant dense<0xFF800000> : vector<1x8xf32>
      %51 = vector.multi_reduction <maximumf>, %50, %cst_39 [2] : vector<1x8x128xf32> to vector<1x8xf32>
      %52 = vector.shape_cast %51 : vector<1x8xf32> to vector<1x8x1xf32>
      %53 = vector.broadcast %52 : vector<1x8x1xf32> to vector<1x8x128xf32>
      %54 = arith.subf %50, %53 : vector<1x8x128xf32>
      %55 = math.exp %54 : vector<1x8x128xf32>
      %cst_40 = arith.constant dense<0.000000e+00> : vector<1x8xf32>
      %56 = vector.multi_reduction <add>, %55, %cst_40 [2] : vector<1x8x128xf32> to vector<1x8xf32>
      %57 = vector.shape_cast %56 : vector<1x8xf32> to vector<1x8x1xf32>
      %58 = math.log %57 : vector<1x8x1xf32>
      %59 = vector.broadcast %58 : vector<1x8x1xf32> to vector<1x8x128xf32>
      %60 = arith.subf %54, %59 : vector<1x8x128xf32>
      %61 = math.exp %60 : vector<1x8x128xf32>
      %62 = arith.mulf %2, %60 : vector<1x8x128xf32>
      %cst_41 = arith.constant 0.000000e+00 : f32
      %63 = vector.broadcast %cst_41 : f32 to vector<1x8x128xf32>
      %64 = arith.subf %63, %62 : vector<1x8x128xf32>
      %cst_42 = arith.constant dense<0.000000e+00> : vector<1x8xf32>
      %65 = vector.multi_reduction <add>, %64, %cst_42 [2] : vector<1x8x128xf32> to vector<1x8xf32>
      %66 = vector.shape_cast %65 : vector<1x8xf32> to vector<1x8x1xf32>
      %cst_43 = arith.constant dense<0.000000e+00> : vector<1x1xf32>
      %67 = vector.multi_reduction <add>, %66, %cst_43 [1] : vector<1x8x1xf32> to vector<1x1xf32>
      %68 = vector.shape_cast %67 : vector<1x1xf32> to vector<1x1x1xf32>
      %69 = vector.broadcast %cst_17 : f32 to vector<1x1x1xf32>
      %70 = arith.mulf %68, %69 : vector<1x1x1xf32>
      %71 = tpu.iota {dimensions = array<i32: 1>} : vector<1x8x128xi32>
      %72 = vector.broadcast %arg10 : i32 to vector<1x8x128xi32>
      %73 = arith.cmpi eq, %71, %72 : vector<1x8x128xi32>
      %cst_44 = arith.constant 0.000000e+00 : f32
      %74 = vector.shape_cast %70 : vector<1x1x1xf32> to vector<1x1x1xf32>
      %75 = vector.broadcast %74 : vector<1x1x1xf32> to vector<1x8x128xf32>
      %76 = vector.broadcast %cst_44 : f32 to vector<1x8x128xf32>
      %77 = arith.select %73, %75, %76 : vector<1x8x128xi1>, vector<1x8x128xf32>
      %78 = arith.addf %arg19, %77 : vector<1x8x128xf32>
      %79 = arith.subf %61, %2 : vector<1x8x128xf32>
      %80 = vector.broadcast %cst_17 : f32 to vector<1x8x128xf32>
      %81 = arith.mulf %79, %80 : vector<1x8x128xf32>
      %82 = arith.truncf %81 : vector<1x8x128xf32> to vector<1x8x128xbf16>
      "tpu.trace_start"() <{level = 10 : i32, message = "esh,esw->ehw"}> : () -> ()
      %cst_45 = arith.constant dense<0.000000e+00> : vector<1x128x128xf32>
      %83 = tpu.matmul %43, %82, %cst_45 {dimension_numbers = #tpu.dot_dimension_numbers<[1], [1], [2], [2], [0, 0, 0, 2, 1, 2], [0], [0]>} : vector<1x8x128xbf16>, vector<1x8x128xbf16>, vector<1x128x128xf32> -> vector<1x128x128xf32>
      "tpu.trace_stop"() : () -> ()
      %cst_46 = arith.constant dense<0.000000e+00> : vector<1x128xf32>
      %84 = vector.multi_reduction <add>, %81, %cst_46 [1] : vector<1x8x128xf32> to vector<1x128xf32>
      %85 = vector.shape_cast %84 : vector<1x128xf32> to vector<1x1x128xf32>
      "tpu.trace_start"() <{level = 10 : i32, message = "esw,ehw->esh"}> : () -> ()
      %cst_47 = arith.constant dense<0.000000e+00> : vector<1x8x128xf32>
      %86 = tpu.matmul %82, %37, %cst_47 {dimension_numbers = #tpu.dot_dimension_numbers<[2], [2], [1], [1], [0, 0, 0, 1, 1, 1], [0], [0]>} : vector<1x8x128xbf16>, vector<1x128x128xbf16>, vector<1x8x128xf32> -> vector<1x8x128xf32>
      %cst_48 = arith.constant 0.000000e+00 : f32
      "tpu.trace_stop"() : () -> ()
      %87 = vector.broadcast %cst_48 : f32 to vector<1x8x128xf32>
      %88 = arith.cmpf ogt, %40, %87 : vector<1x8x128xf32>
      %cst_49 = arith.constant 0.000000e+00 : f32
      %89 = vector.broadcast %cst_49 : f32 to vector<1x8x128xf32>
      %90 = arith.select %88, %86, %89 : vector<1x8x128xi1>, vector<1x8x128xf32>
      %91 = arith.truncf %90 : vector<1x8x128xf32> to vector<1x8x128xbf16>
      "tpu.trace_start"() <{level = 10 : i32, message = "esd,esh->edh"}> : () -> ()
      %cst_50 = arith.constant dense<0.000000e+00> : vector<1x256x128xf32>
      %92 = tpu.matmul %1, %91, %cst_50 {dimension_numbers = #tpu.dot_dimension_numbers<[1], [1], [2], [2], [0, 0, 0, 2, 1, 2], [0], [0]>} : vector<1x8x256xbf16>, vector<1x8x128xbf16>, vector<1x256x128xf32> -> vector<1x256x128xf32>
      "tpu.trace_stop"() : () -> ()
      %cst_51 = arith.constant dense<0.000000e+00> : vector<1x128xf32>
      %93 = vector.multi_reduction <add>, %90, %cst_51 [1] : vector<1x8x128xf32> to vector<1x128xf32>
      %94 = vector.shape_cast %93 : vector<1x128xf32> to vector<1x1x128xf32>
      %95 = vector.broadcast %cst_18 : f32 to vector<1x256x128xf32>
      %96 = arith.mulf %95, %arg11 : vector<1x256x128xf32>
      %97 = arith.addf %92, %96 : vector<1x256x128xf32>
      %98 = vector.broadcast %cst_19 : f32 to vector<1x256x128xf32>
      %99 = arith.mulf %98, %arg15 : vector<1x256x128xf32>
      %100 = arith.addf %97, %99 : vector<1x256x128xf32>
      %101 = vector.broadcast %cst_20 : f32 to vector<1x256x128xf32>
      %102 = arith.mulf %101, %100 : vector<1x256x128xf32>
      %103 = arith.subf %arg11, %102 : vector<1x256x128xf32>
      %104 = vector.broadcast %cst_18 : f32 to vector<1x1x128xf32>
      %105 = arith.mulf %104, %arg12 : vector<1x1x128xf32>
      %106 = arith.addf %94, %105 : vector<1x1x128xf32>
      %107 = vector.broadcast %cst_19 : f32 to vector<1x1x128xf32>
      %108 = arith.mulf %107, %arg16 : vector<1x1x128xf32>
      %109 = arith.addf %106, %108 : vector<1x1x128xf32>
      %110 = vector.broadcast %cst_20 : f32 to vector<1x1x128xf32>
      %111 = arith.mulf %110, %109 : vector<1x1x128xf32>
      %112 = arith.subf %arg12, %111 : vector<1x1x128xf32>
      %113 = vector.broadcast %cst_18 : f32 to vector<1x128x128xf32>
      %114 = arith.mulf %113, %arg13 : vector<1x128x128xf32>
      %115 = arith.addf %83, %114 : vector<1x128x128xf32>
      %116 = vector.broadcast %cst_19 : f32 to vector<1x128x128xf32>
      %117 = arith.mulf %116, %arg17 : vector<1x128x128xf32>
      %118 = arith.addf %115, %117 : vector<1x128x128xf32>
      %119 = vector.broadcast %cst_21 : f32 to vector<1x128x128xf32>
      %120 = arith.mulf %119, %118 : vector<1x128x128xf32>
      %121 = arith.subf %arg13, %120 : vector<1x128x128xf32>
      %122 = vector.broadcast %cst_18 : f32 to vector<1x1x128xf32>
      %123 = arith.mulf %122, %arg14 : vector<1x1x128xf32>
      %124 = arith.addf %85, %123 : vector<1x1x128xf32>
      %125 = vector.broadcast %cst_19 : f32 to vector<1x1x128xf32>
      %126 = arith.mulf %125, %arg18 : vector<1x1x128xf32>
      %127 = arith.addf %124, %126 : vector<1x1x128xf32>
      %128 = vector.broadcast %cst_21 : f32 to vector<1x1x128xf32>
      %129 = arith.mulf %128, %127 : vector<1x1x128xf32>
      %130 = arith.subf %arg14, %129 : vector<1x1x128xf32>
      scf.yield %103, %112, %121, %130, %100, %109, %118, %127, %78 : vector<1x256x128xf32>, vector<1x1x128xf32>, vector<1x128x128xf32>, vector<1x1x128xf32>, vector<1x256x128xf32>, vector<1x1x128xf32>, vector<1x128x128xf32>, vector<1x1x128xf32>, vector<1x8x128xf32>
    }
    %c3_i32_22 = arith.constant 3 : i32
    %c0_23 = arith.constant 0 : index
    %c0_24 = arith.constant 0 : index
    %c0_25 = arith.constant 0 : index
    %21 = vector.load %arg3[%c0_23, %c0_24, %c0_25] : memref<1x8x256xf32, #tpu.memory_space<vmem>>, vector<1x8x256xf32>
    %22 = arith.truncf %21 : vector<1x8x256xf32> to vector<1x8x256xbf16>
    %23 = arith.truncf %20#0 : vector<1x256x128xf32> to vector<1x256x128xbf16>
    %24 = arith.truncf %20#2 : vector<1x128x128xf32> to vector<1x128x128xbf16>
    "tpu.trace_start"() <{level = 10 : i32, message = "eqd,edh->eqh"}> : () -> ()
    %cst_26 = arith.constant dense<0.000000e+00> : vector<1x8x128xf32>
    %25 = tpu.matmul %22, %23, %cst_26 {dimension_numbers = #tpu.dot_dimension_numbers<[2], [1], [1], [2], [0, 0, 0, 1, 1, 2], [0], [0]>} : vector<1x8x256xbf16>, vector<1x256x128xbf16>, vector<1x8x128xf32> -> vector<1x8x128xf32>
    "tpu.trace_stop"() : () -> ()
    %26 = vector.broadcast %20#1 : vector<1x1x128xf32> to vector<1x8x128xf32>
    %27 = arith.addf %25, %26 : vector<1x8x128xf32>
    %cst_27 = arith.constant 0.000000e+00 : f32
    %28 = vector.broadcast %cst_27 : f32 to vector<1x8x128xf32>
    %29 = arith.maximumf %27, %28 : vector<1x8x128xf32>
    %30 = arith.truncf %29 : vector<1x8x128xf32> to vector<1x8x128xbf16>
    "tpu.trace_start"() <{level = 10 : i32, message = "eqh,ehw->eqw"}> : () -> ()
    %cst_28 = arith.constant dense<0.000000e+00> : vector<1x8x128xf32>
    %31 = tpu.matmul %30, %24, %cst_28 {dimension_numbers = #tpu.dot_dimension_numbers<[2], [1], [1], [2], [0, 0, 0, 1, 1, 2], [0], [0]>} : vector<1x8x128xbf16>, vector<1x128x128xbf16>, vector<1x8x128xf32> -> vector<1x8x128xf32>
    "tpu.trace_stop"() : () -> ()
    %32 = vector.broadcast %20#3 : vector<1x1x128xf32> to vector<1x8x128xf32>
    %33 = arith.addf %31, %32 : vector<1x8x128xf32>
    %c0_29 = arith.constant 0 : index
    %c0_30 = arith.constant 0 : index
    %c0_31 = arith.constant 0 : index
    %34 = vector.load %arg8[%c0_29, %c0_30, %c0_31] : memref<1x8x128xf32, #tpu.memory_space<vmem>>, vector<1x8x128xf32>
    tpu.vector_store %arg8[%c0_29, %c0_30, %c0_31], %33 {strides = array<i32>} : memref<1x8x128xf32, #tpu.memory_space<vmem>>, vector<1x8x128xf32>,
    %c0_32 = arith.constant 0 : index
    %c0_33 = arith.constant 0 : index
    %c0_34 = arith.constant 0 : index
    %35 = vector.load %arg9[%c0_32, %c0_33, %c0_34] : memref<1x8x128xf32, #tpu.memory_space<vmem>>, vector<1x8x128xf32>
    tpu.vector_store %arg9[%c0_32, %c0_33, %c0_34], %20#8 {strides = array<i32>} : memref<1x8x128xf32, #tpu.memory_space<vmem>>, vector<1x8x128xf32>,
    return
  }
  func.func @transform_0(%arg0: i32) -> (i32, i32, i32) {
    %c0_i32 = arith.constant 0 : i32
    %c0_i32_0 = arith.constant 0 : i32
    %c0_i32_1 = arith.constant 0 : i32
    return %arg0, %c0_i32, %c0_i32_0 : i32, i32, i32
  }
  func.func @transform_1(%arg0: i32) -> (i32, i32, i32) {
    %c0_i32 = arith.constant 0 : i32
    %c0_i32_0 = arith.constant 0 : i32
    %c0_i32_1 = arith.constant 0 : i32
    return %arg0, %c0_i32, %c0_i32_0 : i32, i32, i32
  }
  func.func @transform_2(%arg0: i32) -> (i32, i32, i32) {
    %c0_i32 = arith.constant 0 : i32
    %c0_i32_0 = arith.constant 0 : i32
    %c0_i32_1 = arith.constant 0 : i32
    return %arg0, %c0_i32, %c0_i32_0 : i32, i32, i32
  }
  func.func @transform_3(%arg0: i32) -> (i32, i32) {
    %c0_i32 = arith.constant 0 : i32
    %c0_i32_0 = arith.constant 0 : i32
    %c0_i32_1 = arith.constant 0 : i32
    return %c0_i32, %c0_i32_0 : i32, i32
  }
  func.func @transform_4(%arg0: i32) -> (i32, i32) {
    %c0_i32 = arith.constant 0 : i32
    %c0_i32_0 = arith.constant 0 : i32
    %c0_i32_1 = arith.constant 0 : i32
    return %c0_i32, %c0_i32_0 : i32, i32
  }
  func.func @transform_5(%arg0: i32) -> (i32, i32) {
    %c0_i32 = arith.constant 0 : i32
    %c0_i32_0 = arith.constant 0 : i32
    %c0_i32_1 = arith.constant 0 : i32
    return %c0_i32, %c0_i32_0 : i32, i32
  }
  func.func @transform_6(%arg0: i32) -> (i32, i32) {
    %c0_i32 = arith.constant 0 : i32
    %c0_i32_0 = arith.constant 0 : i32
    %c0_i32_1 = arith.constant 0 : i32
    return %c0_i32, %c0_i32_0 : i32, i32
  }
  func.func @transform_7(%arg0: i32) -> (i32, i32, i32) {
    %c0_i32 = arith.constant 0 : i32
    %c0_i32_0 = arith.constant 0 : i32
    %c0_i32_1 = arith.constant 0 : i32
    return %arg0, %c0_i32, %c0_i32_0 : i32, i32, i32
  }
  func.func @transform_8(%arg0: i32) -> (i32, i32, i32) {
    %c0_i32 = arith.constant 0 : i32
    %c0_i32_0 = arith.constant 0 : i32
    %c0_i32_1 = arith.constant 0 : i32
    return %arg0, %c0_i32, %c0_i32_0 : i32, i32, i32
  }
}

</mosaic_0001>

<llo_original>
// kernel: tpu_custom_call.1
$region0: #{tpu_custom_call.1}
  #allocation0 [shape = 'u32[]', space=smem, size = 0x4, offset = 0x4, fixed_abs, tag = 'smem constant byte address 0x4 - core index']
  #allocation1 [shape = 'u32[144,128]{1,0:T(1,128)}', space=vmem, size = 0x12000, scoped, tag = 'internal scratch']
  %s0 = inlined_call_operand.hbm [shape: f32[2,8,256], index: 0, kind: input, shape index: {}]
  %s1 = inlined_call_operand.hbm [shape: f32[2,8,128], index: 1, kind: input, shape index: {}]
  %s2 = inlined_call_operand.hbm [shape: f32[2,8,256], index: 2, kind: input, shape index: {}]
  %s3 = inlined_call_operand.hbm [shape: f32[256,128], index: 3, kind: input, shape index: {}]
  %s4 = inlined_call_operand.vmem [shape: f32[1,128], index: 4, kind: input, shape index: {}]
  %s5 = inlined_call_operand.hbm [shape: f32[128,128], index: 5, kind: input, shape index: {}]
  %s6 = inlined_call_operand.vmem [shape: f32[1,128], index: 6, kind: input, shape index: {}]
  %s7 = inlined_call_operand.hbm [shape: f32[2,8,128], index: 7, kind: output, shape index: {0}]
  %s8 = inlined_call_operand.hbm [shape: f32[2,8,128], index: 8, kind: output, shape index: {1}]
  %9 = xla_tuple %s7, %s8
  %s10 = sld [smem:[#allocation0]]
  $region96: #{tpu_custom_call.1} parent=0
    _
  %s12 = ssub.s32 1, %s10
  %s13 = scalar_select 0, %s12, %s10
  $region1: #{tpu_custom_call.1} parent=0
    #allocation2 [shape = 'u8[16384]{0}', space=vmem, size = 0x4000, scoped, tag = 'input window, operand 0']
    #allocation3 [shape = 's32[2]{0}', space=sflag, size = 0x8, scoped, tag = 'scoped memory for tpu_custom_call.1']
    #allocation4 [shape = 's32[2]{0}', space=sflag, size = 0x8, scoped, tag = 'scoped memory for tpu_custom_call.1']
    #allocation5 [shape = 'u8[8192]{0}', space=vmem, size = 0x2000, scoped, tag = 'input window, operand 1']
    #allocation6 [shape = 's32[2]{0}', space=sflag, size = 0x8, scoped, tag = 'scoped memory for tpu_custom_call.1']
    #allocation7 [shape = 'u8[16384]{0}', space=vmem, size = 0x4000, scoped, tag = 'input window, operand 2']
    #allocation8 [shape = 'u8[131072]{0}', space=vmem, size = 0x20000, scoped, tag = 'input window, operand 3, single buffered']
    #allocation9 [shape = 's32[1]{0}', space=sflag, size = 0x4, scoped, tag = 'scoped memory for tpu_custom_call.1']
    #allocation10 [shape = 'u8[65536]{0}', space=vmem, size = 0x10000, scoped, tag = 'input window, operand 5, single buffered']
    #allocation11 [shape = 'u8[8192]{0}', space=vmem, size = 0x2000, scoped, tag = 'output window, operand 0']
    #allocation12 [shape = 'u8[8192]{0}', space=vmem, size = 0x2000, scoped, tag = 'output window, operand 1']
    #allocation13 [shape = 's32[2]{0}', space=sflag, size = 0x8, scoped, tag = 'scoped memory for tpu_custom_call.1']
    %14 = vsyncpa [#allocation3], 0
    %s15 = scalar_lea.sflag [#allocation3], 1
    %16 = vsyncpa %s15, 0
    %17 = vsyncpa [#allocation6], 0
    %s18 = scalar_lea.sflag [#allocation6], 1
    %19 = vsyncpa %s18, 0
    %20 = vsyncpa [#allocation9], 0
    %21 = vsyncpa [#allocation4], 0
    %s22 = scalar_lea.sflag [#allocation4], 1
    %23 = vsyncpa %s22, 0
    %24 = vsyncpa [#allocation13], 0
    %s25 = scalar_lea.sflag [#allocation13], 1
    %26 = vsyncpa %s25, 0
    loop: start=0, step=1, limit=4
    $region2: #{tpu_custom_call.1} parent=1 // loop_pre_header
      _
    $region3: #{tpu_custom_call.1} parent=1 // loop_header
      %s28 = sphi 0, %s32
      %p29 = scmp.ge.s32.totalorder %s28, 4
      %s38 = sphi 0, %s40
      %s41 = sphi 0, %s38
      %s42 = sphi 0, %s41
      %s58 = sphi 0, %s42
      %s64 = sphi 0, %s66
      %s67 = sphi 0, %s64
      %s68 = sphi 0, %s67
      %s84 = sphi 0, %s68
      %s90 = sphi 0, %s92
      %s93 = sphi 0, %s90
      %s94 = sphi 0, %s93
      %s110 = sphi 0, %s94
      %s114 = sphi 0, %s114
      %s116 = sphi 0, %s114
      %s117 = sphi 0, %s116
      %s131 = sphi 0, %s117
      %s135 = sphi 0, %s135
      %s137 = sphi 0, %s135
      %s138 = sphi 0, %s137
      %s152 = sphi 0, %s138
      %s156 = sphi 0, %s156
      %s158 = sphi 0, %s156
      %s159 = sphi 0, %s158
      %s173 = sphi 0, %s159
      %s177 = sphi 0, %s177
      %s179 = sphi 0, %s177
      %s180 = sphi 0, %s179
      %s194 = sphi 0, %s180
      %s200 = sphi 0, %s202
      %s203 = sphi 0, %s200
      %s204 = sphi 0, %s203
      %s220 = sphi 0, %s204
      %s226 = sphi 0, %s228
      %s229 = sphi 0, %s226
      %s230 = sphi 0, %s229
      %s246 = sphi 0, %s230
    $region4: #{tpu_custom_call.1} parent=1 // loop_header_branch
      %31 = sbr.rel (%p29) target = $region8
    $region5: #{tpu_custom_call.1} parent=1 // loop_body
      %s33 = ssub.s32 %s28, 1
      %s34 = ssub.s32 %s28, 2
      %s35 = sadd.s32 %s28, 1
      %s36 = ssub.s32 %s28, %s35
      %p37 = scmp.eq.s32.totalorder %s36, 0
      %s39 = sadd.s32 %s38, 1
      %s40 = scalar_select %p37, %s38, %s39
      %p43 = pneg %p37
      %p44 = scmp.eq.s32.totalorder %s28, 1
      %p45 = por %p43, %p44
      %p46 = scmp.ne.s32.totalorder %s38, %s41
      %p47 = scmp.eq.s32.totalorder %s28, 0
      %p48 = por %p46, %p47
      %p49 = scmp.ne.s32.totalorder %s38, %s41
      %p50 = scmp.eq.s32.totalorder %s33, 1
      %p51 = por %p49, %p50
      %p52 = scmp.ne.s32.totalorder %s41, %s42
      %p53 = scmp.eq.s32.totalorder %s33, 0
      %p54 = por %p52, %p53
      %p55 = scmp.ne.s32.totalorder %s41, %s42
      %p56 = scmp.eq.s32.totalorder %s34, 1
      %p57 = por %p55, %p56
      %p59 = scmp.ne.s32.totalorder %s42, %s58
      %p60 = scmp.eq.s32.totalorder %s34, 0
      %p61 = por %p59, %p60
      %s62 = ssub.s32 %s28, %s35
      %p63 = scmp.eq.s32.totalorder %s62, 0
      %s65 = sadd.s32 %s64, 1
      %s66 = scalar_select %p63, %s64, %s65
      %p69 = pneg %p63
      %p70 = scmp.eq.s32.totalorder %s28, 1
      %p71 = por %p69, %p70
      %p72 = scmp.ne.s32.totalorder %s64, %s67
      %p73 = scmp.eq.s32.totalorder %s28, 0
      %p74 = por %p72, %p73
      %p75 = scmp.ne.s32.totalorder %s64, %s67
      %p76 = scmp.eq.s32.totalorder %s33, 1
      %p77 = por %p75, %p76
      %p78 = scmp.ne.s32.totalorder %s67, %s68
      %p79 = scmp.eq.s32.totalorder %s33, 0
      %p80 = por %p78, %p79
      %p81 = scmp.ne.s32.totalorder %s67, %s68
      %p82 = scmp.eq.s32.totalorder %s34, 1
      %p83 = por %p81, %p82
      %p85 = scmp.ne.s32.totalorder %s68, %s84
      %p86 = scmp.eq.s32.totalorder %s34, 0
      %p87 = por %p85, %p86
      %s88 = ssub.s32 %s28, %s35
      %p89 = scmp.eq.s32.totalorder %s88, 0
      %s91 = sadd.s32 %s90, 1
      %s92 = scalar_select %p89, %s90, %s91
      %p95 = pneg %p89
      %p96 = scmp.eq.s32.totalorder %s28, 1
      %p97 = por %p95, %p96
      %p98 = scmp.ne.s32.totalorder %s90, %s93
      %p99 = scmp.eq.s32.totalorder %s28, 0
      %p100 = por %p98, %p99
      %p101 = scmp.ne.s32.totalorder %s90, %s93
      %p102 = scmp.eq.s32.totalorder %s33, 1
      %p103 = por %p101, %p102
      %p104 = scmp.ne.s32.totalorder %s93, %s94
      %p105 = scmp.eq.s32.totalorder %s33, 0
      %p106 = por %p104, %p105
      %p107 = scmp.ne.s32.totalorder %s93, %s94
      %p108 = scmp.eq.s32.totalorder %s34, 1
      %p109 = por %p107, %p108
      %p111 = scmp.ne.s32.totalorder %s94, %s110
      %p112 = scmp.eq.s32.totalorder %s34, 0
      %p113 = por %p111, %p112
      %s115 = sadd.s32 %s114, 1
      %p118 = scmp.eq.s32.totalorder %s28, 1
      %p119 = scmp.ne.s32.totalorder %s114, %s116
      %p120 = scmp.eq.s32.totalorder %s28, 0
      %p121 = por %p119, %p120
      %p122 = scmp.ne.s32.totalorder %s114, %s116
      %p123 = scmp.eq.s32.totalorder %s33, 1
      %p124 = por %p122, %p123
      %p125 = scmp.ne.s32.totalorder %s116, %s117
      %p126 = scmp.eq.s32.totalorder %s33, 0
      %p127 = por %p125, %p126
      %p128 = scmp.ne.s32.totalorder %s116, %s117
      %p129 = scmp.eq.s32.totalorder %s34, 1
      %p130 = por %p128, %p129
      %p132 = scmp.ne.s32.totalorder %s117, %s131
      %p133 = scmp.eq.s32.totalorder %s34, 0
      %p134 = por %p132, %p133
      %s136 = sadd.s32 %s135, 1
      %p139 = scmp.eq.s32.totalorder %s28, 1
      %p140 = scmp.ne.s32.totalorder %s135, %s137
      %p141 = scmp.eq.s32.totalorder %s28, 0
      %p142 = por %p140, %p141
      %p143 = scmp.ne.s32.totalorder %s135, %s137
      %p144 = scmp.eq.s32.totalorder %s33, 1
      %p145 = por %p143, %p144
      %p146 = scmp.ne.s32.totalorder %s137, %s138
      %p147 = scmp.eq.s32.totalorder %s33, 0
      %p148 = por %p146, %p147
      %p149 = scmp.ne.s32.totalorder %s137, %s138
      %p150 = scmp.eq.s32.totalorder %s34, 1
      %p151 = por %p149, %p150
      %p153 = scmp.ne.s32.totalorder %s138, %s152
      %p154 = scmp.eq.s32.totalorder %s34, 0
      %p155 = por %p153, %p154
      %s157 = sadd.s32 %s156, 1
      %p160 = scmp.eq.s32.totalorder %s28, 1
      %p161 = scmp.ne.s32.totalorder %s156, %s158
      %p162 = scmp.eq.s32.totalorder %s28, 0
      %p163 = por %p161, %p162
      %p164 = scmp.ne.s32.totalorder %s156, %s158
      %p165 = scmp.eq.s32.totalorder %s33, 1
      %p166 = por %p164, %p165
      %p167 = scmp.ne.s32.totalorder %s158, %s159
      %p168 = scmp.eq.s32.totalorder %s33, 0
      %p169 = por %p167, %p168
      %p170 = scmp.ne.s32.totalorder %s158, %s159
      %p171 = scmp.eq.s32.totalorder %s34, 1
      %p172 = por %p170, %p171
      %p174 = scmp.ne.s32.totalorder %s159, %s173
      %p175 = scmp.eq.s32.totalorder %s34, 0
      %p176 = por %p174, %p175
      %s178 = sadd.s32 %s177, 1
      %p181 = scmp.eq.s32.totalorder %s28, 1
      %p182 = scmp.ne.s32.totalorder %s177, %s179
      %p183 = scmp.eq.s32.totalorder %s28, 0
      %p184 = por %p182, %p183
      %p185 = scmp.ne.s32.totalorder %s177, %s179
      %p186 = scmp.eq.s32.totalorder %s33, 1
      %p187 = por %p185, %p186
      %p188 = scmp.ne.s32.totalorder %s179, %s180
      %p189 = scmp.eq.s32.totalorder %s33, 0
      %p190 = por %p188, %p189
      %p191 = scmp.ne.s32.totalorder %s179, %s180
      %p192 = scmp.eq.s32.totalorder %s34, 1
      %p193 = por %p191, %p192
      %p195 = scmp.ne.s32.totalorder %s180, %s194
      %p196 = scmp.eq.s32.totalorder %s34, 0
      %p197 = por %p195, %p196
      %s198 = ssub.s32 %s28, %s35
      %p199 = scmp.eq.s32.totalorder %s198, 0
      %s201 = sadd.s32 %s200, 1
      %s202 = scalar_select %p199, %s200, %s201
      %p205 = pneg %p199
      %p206 = scmp.eq.s32.totalorder %s28, 1
      %p207 = por %p205, %p206
      %p208 = scmp.ne.s32.totalorder %s200, %s203
      %p209 = scmp.eq.s32.totalorder %s28, 0
      %p210 = por %p208, %p209
      %p211 = scmp.ne.s32.totalorder %s200, %s203
      %p212 = scmp.eq.s32.totalorder %s33, 1
      %p213 = por %p211, %p212
      %p214 = scmp.ne.s32.totalorder %s203, %s204
      %p215 = scmp.eq.s32.totalorder %s33, 0
      %p216 = por %p214, %p215
      %p217 = scmp.ne.s32.totalorder %s203, %s204
      %p218 = scmp.eq.s32.totalorder %s34, 1
      %p219 = por %p217, %p218
      %p221 = scmp.ne.s32.totalorder %s204, %s220
      %p222 = scmp.eq.s32.totalorder %s34, 0
      %p223 = por %p221, %p222
      %s224 = ssub.s32 %s28, %s35
      %p225 = scmp.eq.s32.totalorder %s224, 0
      %s227 = sadd.s32 %s226, 1
      %s228 = scalar_select %p225, %s226, %s227
      %p231 = pneg %p225
      %p232 = scmp.eq.s32.totalorder %s28, 1
      %p233 = por %p231, %p232
      %p234 = scmp.ne.s32.totalorder %s226, %s229
      %p235 = scmp.eq.s32.totalorder %s28, 0
      %p236 = por %p234, %p235
      %p237 = scmp.ne.s32.totalorder %s226, %s229
      %p238 = scmp.eq.s32.totalorder %s33, 1
      %p239 = por %p237, %p238
      %p240 = scmp.ne.s32.totalorder %s229, %s230
      %p241 = scmp.eq.s32.totalorder %s33, 0
      %p242 = por %p240, %p241
      %p243 = scmp.ne.s32.totalorder %s229, %s230
      %p244 = scmp.eq.s32.totalorder %s34, 1
      %p245 = por %p243, %p244
      %p247 = scmp.ne.s32.totalorder %s230, %s246
      %p248 = scmp.eq.s32.totalorder %s34, 0
      %p249 = por %p247, %p248
      %p250 = scmp.le.s32.totalorder 1, %s28
      %p251 = scmp.lt.s32.totalorder %s28, 3
      %p252 = pnand %p250, %p251
      %p253 = pneg %p252
      // Predicated region
      $region9: #{tpu_custom_call.1} parent=5 // pred_check
        _
      $region10: #{tpu_custom_call.1} parent=5 // pred_check_branch
        %255 = sbr.rel (%p252) target = $region12
      $region11: #{tpu_custom_call.1} parent=5 // pred_region
        %s256 = ssub.s32 %s28, 1
        // Predicated region
        $region13: #{tpu_custom_call.1} parent=11 // pred_check
          %p257 = pneg %p127
        $region14: #{tpu_custom_call.1} parent=11 // pred_check_branch
          %259 = sbr.rel (%p257) target = $region16
        $region15: #{tpu_custom_call.1} parent=11 // pred_region
          %s261 = ssub.s32 4096, 4096
          %262 = vsyncadd [#allocation9], %s261
          %s263 = sshll.u32 [#allocation8], 4
          %s264 = int_to_ptr.vmem [resolvable:$true] %s263
          %269 = dma.hbm_to_vmem [thread:$0]  %s3, 4096, %s264, [#allocation9], 128, 128, 8
        $region16: #{tpu_custom_call.1} parent=11 // pred_fallthru
          _
        // Predicated region
        $region17: #{tpu_custom_call.1} parent=11 // pred_check
          %p270 = pneg %p148
        $region18: #{tpu_custom_call.1} parent=11 // pred_check_branch
          %272 = sbr.rel (%p270) target = $region20
        $region19: #{tpu_custom_call.1} parent=11 // pred_region
          _
        $region20: #{tpu_custom_call.1} parent=11 // pred_fallthru
          _
        // Predicated region
        $region21: #{tpu_custom_call.1} parent=11 // pred_check
          %p273 = pneg %p169
        $region22: #{tpu_custom_call.1} parent=11 // pred_check_branch
          %275 = sbr.rel (%p273) target = $region24
        $region23: #{tpu_custom_call.1} parent=11 // pred_region
          %s277 = ssub.s32 2048, 2048
          %278 = vsyncadd [#allocation9], %s277
          %s279 = sshll.u32 [#allocation10], 4
          %s280 = int_to_ptr.vmem [resolvable:$true] %s279
          %285 = dma.hbm_to_vmem [thread:$0]  %s5, 2048, %s280, [#allocation9], 128, 128, 8
        $region24: #{tpu_custom_call.1} parent=11 // pred_fallthru
          _
        // Predicated region
        $region25: #{tpu_custom_call.1} parent=11 // pred_check
          %p286 = pneg %p190
        $region26: #{tpu_custom_call.1} parent=11 // pred_check_branch
          %288 = sbr.rel (%p286) target = $region28
        $region27: #{tpu_custom_call.1} parent=11 // pred_region
          _
        $region28: #{tpu_custom_call.1} parent=11 // pred_fallthru
          _
      $region12: #{tpu_custom_call.1} parent=5 // pred_fallthru
        _
      %p289 = scmp.lt.s32.totalorder %s28, 2
      // Predicated region
      $region29: #{tpu_custom_call.1} parent=5 // pred_check
        %p290 = pneg %p289
      $region30: #{tpu_custom_call.1} parent=5 // pred_check_branch
        %292 = sbr.rel (%p290) target = $region32
      $region31: #{tpu_custom_call.1} parent=5 // pred_region
        // Predicated region
        $region33: #{tpu_custom_call.1} parent=31 // pred_check
          %p293 = pneg %p48
        $region34: #{tpu_custom_call.1} parent=31 // pred_check_branch
          %295 = sbr.rel (%p293) target = $region36
        $region35: #{tpu_custom_call.1} parent=31 // pred_region
          %s296 = sand.u32 %s38, 1
          %s297 = scalar_lea.sflag [#allocation3], %s296
          %s298 = sand.u32 %s38, 1
          %s299 = smul.addr %s298, 16
          %s300 = scalar_lea.vmem [#allocation2], %s299
          %s302 = ssub.s32 256, 256
          %303 = vsyncadd %s297, %s302
          %s304 = smul.addr %s28, 2
          %s305 = smul.addr %s304, 128
          %s306 = scalar_lea.hbm %s0, %s305
          %s308 = sshll.u32 %s300, 4
          %s309 = int_to_ptr.vmem [resolvable:$true] %s308
          %311 = dma.hbm_to_vmem [thread:$0]  %s306, 256, %s309, %s297
        $region36: #{tpu_custom_call.1} parent=31 // pred_fallthru
          _
        // Predicated region
        $region37: #{tpu_custom_call.1} parent=31 // pred_check
          %p312 = pneg %p74
        $region38: #{tpu_custom_call.1} parent=31 // pred_check_branch
          %314 = sbr.rel (%p312) target = $region40
        $region39: #{tpu_custom_call.1} parent=31 // pred_region
          %s315 = sand.u32 %s28, 1
          %s316 = scalar_lea.sflag [#allocation6], %s315
          %s317 = sand.u32 %s64, 1
          %s318 = smul.addr %s317, 8
          %s319 = scalar_lea.vmem [#allocation5], %s318
          %s321 = ssub.s32 128, 128
          %322 = vsyncadd %s316, %s321
          %s323 = smul.addr %s28, 128
          %s324 = scalar_lea.hbm %s1, %s323
          %s326 = sshll.u32 %s319, 4
          %s327 = int_to_ptr.vmem [resolvable:$true] %s326
          %329 = dma.hbm_to_vmem [thread:$0]  %s324, 128, %s327, %s316
        $region40: #{tpu_custom_call.1} parent=31 // pred_fallthru
          _
        // Predicated region
        $region41: #{tpu_custom_call.1} parent=31 // pred_check
          %p330 = pneg %p100
        $region42: #{tpu_custom_call.1} parent=31 // pred_check_branch
          %332 = sbr.rel (%p330) target = $region44
        $region43: #{tpu_custom_call.1} parent=31 // pred_region
          %s333 = sand.u32 %s28, 1
          %s334 = scalar_lea.sflag [#allocation6], %s333
          %s335 = sand.u32 %s90, 1
          %s336 = smul.addr %s335, 16
          %s337 = scalar_lea.vmem [#allocation7], %s336
          %s339 = ssub.s32 256, 256
          %340 = vsyncadd %s334, %s339
          %s341 = smul.addr %s28, 2
          %s342 = smul.addr %s341, 128
          %s343 = scalar_lea.hbm %s2, %s342
          %s345 = sshll.u32 %s337, 4
          %s346 = int_to_ptr.vmem [resolvable:$true] %s345
          %348 = dma.hbm_to_vmem [thread:$0]  %s343, 256, %s346, %s334
        $region44: #{tpu_custom_call.1} parent=31 // pred_fallthru
          _
      $region32: #{tpu_custom_call.1} parent=5 // pred_fallthru
        _
      %p349 = scmp.le.s32.totalorder 1, %s28
      %p350 = scmp.lt.s32.totalorder %s28, 3
      %p351 = pnand %p349, %p350
      %p352 = pneg %p351
      // Predicated region
      $region45: #{tpu_custom_call.1} parent=5 // pred_check
        _
      $region46: #{tpu_custom_call.1} parent=5 // pred_check_branch
        %354 = sbr.rel (%p351) target = $region48
      $region47: #{tpu_custom_call.1} parent=5 // pred_region
        %s355 = ssub.s32 %s28, 1
        %s356 = sand.u32 %s41, 1
        %s357 = scalar_lea.sflag [#allocation3], %s356
        %s358 = sand.u32 %s41, 1
        %s359 = smul.addr %s358, 16
        %s360 = scalar_lea.vmem [#allocation2], %s359
        // Predicated region
        $region49: #{tpu_custom_call.1} parent=47 // pred_check
          %p361 = pneg %p54
        $region50: #{tpu_custom_call.1} parent=47 // pred_check_branch
          %363 = sbr.rel (%p361) target = $region52
        $region51: #{tpu_custom_call.1} parent=47 // pred_region
          %364 = dma.done %s357, 256
        $region52: #{tpu_custom_call.1} parent=47 // pred_fallthru
          _
        %s365 = sand.u32 %s33, 1
        %s366 = scalar_lea.sflag [#allocation6], %s365
        %s367 = sand.u32 %s67, 1
        %s368 = smul.addr %s367, 8
        %s369 = scalar_lea.vmem [#allocation5], %s368
        // Predicated region
        $region53: #{tpu_custom_call.1} parent=47 // pred_check
          %p370 = pneg %p80
        $region54: #{tpu_custom_call.1} parent=47 // pred_check_branch
          %372 = sbr.rel (%p370) target = $region56
        $region55: #{tpu_custom_call.1} parent=47 // pred_region
          %373 = dma.done %s366, 128
        $region56: #{tpu_custom_call.1} parent=47 // pred_fallthru
          _
        %s374 = sand.u32 %s33, 1
        %s375 = scalar_lea.sflag [#allocation6], %s374
        %s376 = sand.u32 %s93, 1
        %s377 = smul.addr %s376, 16
        %s378 = scalar_lea.vmem [#allocation7], %s377
        // Predicated region
        $region57: #{tpu_custom_call.1} parent=47 // pred_check
          %p379 = pneg %p106
        $region58: #{tpu_custom_call.1} parent=47 // pred_check_branch
          %381 = sbr.rel (%p379) target = $region60
        $region59: #{tpu_custom_call.1} parent=47 // pred_region
          %382 = dma.done %s375, 256
        $region60: #{tpu_custom_call.1} parent=47 // pred_fallthru
          _
        // Predicated region
        $region61: #{tpu_custom_call.1} parent=47 // pred_check
          %p383 = pneg %p127
        $region62: #{tpu_custom_call.1} parent=47 // pred_check_branch
          %385 = sbr.rel (%p383) target = $region64
        $region63: #{tpu_custom_call.1} parent=47 // pred_region
          %386 = dma.done [#allocation9], 4096
        $region64: #{tpu_custom_call.1} parent=47 // pred_fallthru
          _
        // Predicated region
        $region65: #{tpu_custom_call.1} parent=47 // pred_check
          %p387 = pneg %p169
        $region66: #{tpu_custom_call.1} parent=47 // pred_check_branch
          %389 = sbr.rel (%p387) target = $region68
        $region67: #{tpu_custom_call.1} parent=47 // pred_region
          %390 = dma.done [#allocation9], 2048
        $region68: #{tpu_custom_call.1} parent=47 // pred_fallthru
          _
        %s391 = sand.u32 %s41, 1
        %s392 = scalar_lea.sflag [#allocation3], %s391
        %s393 = sand.u32 %s41, 1
        %s394 = smul.addr %s393, 16
        %s395 = scalar_lea.vmem [#allocation2], %s394
        %p396 = pneg %p54
        %p397 = pneg %p51
        %s398 = sand.u32 %s33, 1
        %s399 = scalar_lea.sflag [#allocation6], %s398
        %s400 = sand.u32 %s67, 1
        %s401 = smul.addr %s400, 8
        %s402 = scalar_lea.vmem [#allocation5], %s401
        %p403 = pneg %p80
        %p404 = pneg %p77
        %s405 = sand.u32 %s33, 1
        %s406 = scalar_lea.sflag [#allocation6], %s405
        %s407 = sand.u32 %s93, 1
        %s408 = smul.addr %s407, 16
        %s409 = scalar_lea.vmem [#allocation7], %s408
        %p410 = pneg %p106
        %p411 = pneg %p103
        %p412 = pneg %p127
        %p413 = pneg %p124
        %p414 = pneg %p148
        %p415 = pneg %p145
        %p416 = pneg %p169
        %p417 = pneg %p166
        %p418 = pneg %p190
        %p419 = pneg %p187
        %p420 = pneg %p216
        %p421 = pneg %p213
        %s422 = sand.u32 %s203, 1
        %s423 = scalar_lea.sflag [#allocation4], %s422
        %s424 = sand.u32 %s203, 1
        %s425 = smul.addr %s424, 8
        %s426 = scalar_lea.vmem [#allocation11], %s425
        %p427 = pneg %p242
        %p428 = pneg %p239
        %s429 = sand.u32 %s229, 1
        %s430 = scalar_lea.sflag [#allocation13], %s429
        %s431 = sand.u32 %s229, 1
        %s432 = smul.addr %s431, 8
        %s433 = scalar_lea.vmem [#allocation12], %s432
        %v435 = vld [vmem:[%s360] sm:$0xff]
        %v436 = vld [vmem:[%s360 + $0x8] sm:$0xff]
        %v437 = vpack.c.bf16 %v435, %v435
        %v438 = vpack.c.bf16 %v436, %v436
        %v439 = vld [vmem:[%s369] sm:$0xff]
        %v440 = vld [vmem:[#allocation8] sm:$0xff]
        %v441 = vld [vmem:[#allocation8 + $0x8] sm:$0xff]
        %v442 = vld [vmem:[#allocation8 + $0x10] sm:$0xff]
        %v443 = vld [vmem:[#allocation8 + $0x18] sm:$0xff]
        %v444 = vld [vmem:[#allocation8 + $0x20] sm:$0xff]
        %v445 = vld [vmem:[#allocation8 + $0x28] sm:$0xff]
        %v446 = vld [vmem:[#allocation8 + $0x30] sm:$0xff]
        %v447 = vld [vmem:[#allocation8 + $0x38] sm:$0xff]
        %v448 = vld [vmem:[#allocation8 + $0x40] sm:$0xff]
        %v449 = vld [vmem:[#allocation8 + $0x48] sm:$0xff]
        %v450 = vld [vmem:[#allocation8 + $0x50] sm:$0xff]
        %v451 = vld [vmem:[#allocation8 + $0x58] sm:$0xff]
        %v452 = vld [vmem:[#allocation8 + $0x60] sm:$0xff]
        %v453 = vld [vmem:[#allocation8 + $0x68] sm:$0xff]
        %v454 = vld [vmem:[#allocation8 + $0x70] sm:$0xff]
        %v455 = vld [vmem:[#allocation8 + $0x78] sm:$0xff]
        %v456 = vld [vmem:[#allocation8 + $0x80] sm:$0xff]
        %v457 = vld [vmem:[#allocation8 + $0x88] sm:$0xff]
        %v458 = vld [vmem:[#allocation8 + $0x90] sm:$0xff]
        %v459 = vld [vmem:[#allocation8 + $0x98] sm:$0xff]
        %v460 = vld [vmem:[#allocation8 + $0xa0] sm:$0xff]
        %v461 = vld [vmem:[#allocation8 + $0xa8] sm:$0xff]
        %v462 = vld [vmem:[#allocation8 + $0xb0] sm:$0xff]
        %v463 = vld [vmem:[#allocation8 + $0xb8] sm:$0xff]
        %v464 = vld [vmem:[#allocation8 + $0xc0] sm:$0xff]
        %v465 = vld [vmem:[#allocation8 + $0xc8] sm:$0xff]
        %v466 = vld [vmem:[#allocation8 + $0xd0] sm:$0xff]
        %v467 = vld [vmem:[#allocation8 + $0xd8] sm:$0xff]
        %v468 = vld [vmem:[#allocation8 + $0xe0] sm:$0xff]
        %v469 = vld [vmem:[#allocation8 + $0xe8] sm:$0xff]
        %v470 = vld [vmem:[#allocation8 + $0xf0] sm:$0xff]
        %v471 = vld [vmem:[#allocation8 + $0xf8] sm:$0xff]
        %v472 = vld [vmem:[%s4] sm:$0x1]
        %v473 = vld [vmem:[#allocation10] sm:$0xff]
        %v474 = vld [vmem:[#allocation10 + $0x8] sm:$0xff]
        %v475 = vld [vmem:[#allocation10 + $0x10] sm:$0xff]
        %v476 = vld [vmem:[#allocation10 + $0x18] sm:$0xff]
        %v477 = vld [vmem:[#allocation10 + $0x20] sm:$0xff]
        %v478 = vld [vmem:[#allocation10 + $0x28] sm:$0xff]
        %v479 = vld [vmem:[#allocation10 + $0x30] sm:$0xff]
        %v480 = vld [vmem:[#allocation10 + $0x38] sm:$0xff]
        %v481 = vld [vmem:[#allocation10 + $0x40] sm:$0xff]
        %v482 = vld [vmem:[#allocation10 + $0x48] sm:$0xff]
        %v483 = vld [vmem:[#allocation10 + $0x50] sm:$0xff]
        %v484 = vld [vmem:[#allocation10 + $0x58] sm:$0xff]
        %v485 = vld [vmem:[#allocation10 + $0x60] sm:$0xff]
        %v486 = vld [vmem:[#allocation10 + $0x68] sm:$0xff]
        %v487 = vld [vmem:[#allocation10 + $0x70] sm:$0xff]
        %v488 = vld [vmem:[#allocation10 + $0x78] sm:$0xff]
        %v489 = vld [vmem:[%s6] sm:$0x1]
        %v490 = vlaneseq
        %v491 = vand.u32 %v490, 127
        %vm492 = vcmp.lt.s32.totalorder %v491, 4
        loop: start=0, step=1, limit=3
        $region69: #{tpu_custom_call.1} parent=47 // loop_pre_header
          _
        $region70: #{tpu_custom_call.1} parent=47 // loop_header
          %s494 = sphi 0, %s498
          %p495 = scmp.ge.s32.totalorder %s494, 3
          %v499 = vphi %v440, %v1182
          %v500 = vphi %v441, %v1183
          %v501 = vphi %v442, %v1184
          %v502 = vphi %v443, %v1185
          %v503 = vphi %v444, %v1186
          %v504 = vphi %v445, %v1187
          %v505 = vphi %v446, %v1188
          %v506 = vphi %v447, %v1189
          %v507 = vphi %v448, %v1190
          %v508 = vphi %v449, %v1191
          %v509 = vphi %v450, %v1192
          %v510 = vphi %v451, %v1193
          %v511 = vphi %v452, %v1194
          %v512 = vphi %v453, %v1195
          %v513 = vphi %v454, %v1196
          %v514 = vphi %v455, %v1197
          %v515 = vphi %v456, %v1198
          %v516 = vphi %v457, %v1199
          %v517 = vphi %v458, %v1200
          %v518 = vphi %v459, %v1201
          %v519 = vphi %v460, %v1202
          %v520 = vphi %v461, %v1203
          %v521 = vphi %v462, %v1204
          %v522 = vphi %v463, %v1205
          %v523 = vphi %v464, %v1206
          %v524 = vphi %v465, %v1207
          %v525 = vphi %v466, %v1208
          %v526 = vphi %v467, %v1209
          %v527 = vphi %v468, %v1210
          %v528 = vphi %v469, %v1211
          %v529 = vphi %v470, %v1212
          %v530 = vphi %v471, %v1213
          %v531 = vphi %v472, %v1219
          %v532 = vphi %v473, %v1424
          %v533 = vphi %v474, %v1425
          %v534 = vphi %v475, %v1426
          %v535 = vphi %v476, %v1427
          %v536 = vphi %v477, %v1428
          %v537 = vphi %v478, %v1429
          %v538 = vphi %v479, %v1430
          %v539 = vphi %v480, %v1431
          %v540 = vphi %v481, %v1432
          %v541 = vphi %v482, %v1433
          %v542 = vphi %v483, %v1434
          %v543 = vphi %v484, %v1435
          %v544 = vphi %v485, %v1436
          %v545 = vphi %v486, %v1437
          %v546 = vphi %v487, %v1438
          %v547 = vphi %v488, %v1439
          %v548 = vphi %v489, %v1445
          %v549 = vphi 0.0, %v1118
          %v550 = vphi 0.0, %v1119
          %v551 = vphi 0.0, %v1120
          %v552 = vphi 0.0, %v1121
          %v553 = vphi 0.0, %v1122
          %v554 = vphi 0.0, %v1123
          %v555 = vphi 0.0, %v1124
          %v556 = vphi 0.0, %v1125
          %v557 = vphi 0.0, %v1126
          %v558 = vphi 0.0, %v1127
          %v559 = vphi 0.0, %v1128
          %v560 = vphi 0.0, %v1129
          %v561 = vphi 0.0, %v1130
          %v562 = vphi 0.0, %v1131
          %v563 = vphi 0.0, %v1132
          %v564 = vphi 0.0, %v1133
          %v565 = vphi 0.0, %v1134
          %v566 = vphi 0.0, %v1135
          %v567 = vphi 0.0, %v1136
          %v568 = vphi 0.0, %v1137
          %v569 = vphi 0.0, %v1138
          %v570 = vphi 0.0, %v1139
          %v571 = vphi 0.0, %v1140
          %v572 = vphi 0.0, %v1141
          %v573 = vphi 0.0, %v1142
          %v574 = vphi 0.0, %v1143
          %v575 = vphi 0.0, %v1144
          %v576 = vphi 0.0, %v1145
          %v577 = vphi 0.0, %v1146
          %v578 = vphi 0.0, %v1147
          %v579 = vphi 0.0, %v1148
          %v580 = vphi 0.0, %v1149
          %v581 = vphi 0.0, %v1217
          %v582 = vphi 0.0, %v1392
          %v583 = vphi 0.0, %v1393
          %v584 = vphi 0.0, %v1394
          %v585 = vphi 0.0, %v1395
          %v586 = vphi 0.0, %v1396
          %v587 = vphi 0.0, %v1397
          %v588 = vphi 0.0, %v1398
          %v589 = vphi 0.0, %v1399
          %v590 = vphi 0.0, %v1400
          %v591 = vphi 0.0, %v1401
          %v592 = vphi 0.0, %v1402
          %v593 = vphi 0.0, %v1403
          %v594 = vphi 0.0, %v1404
          %v595 = vphi 0.0, %v1405
          %v596 = vphi 0.0, %v1406
          %v597 = vphi 0.0, %v1407
          %v598 = vphi 0.0, %v1443
          %v599 = vphi 0.0, %v749
        $region71: #{tpu_custom_call.1} parent=47 // loop_header_branch
          %497 = sbr.rel (%p495) target = $region75
        $region72: #{tpu_custom_call.1} parent=47 // loop_body
          %v600 = vpack.c.bf16 %v500, %v499
          %v601 = vpack.c.bf16 %v502, %v501
          %v602 = vpack.c.bf16 %v504, %v503
          %v603 = vpack.c.bf16 %v506, %v505
          %v604 = vpack.c.bf16 %v508, %v507
          %v605 = vpack.c.bf16 %v510, %v509
          %v606 = vpack.c.bf16 %v512, %v511
          %v607 = vpack.c.bf16 %v514, %v513
          %v608 = vpack.c.bf16 %v516, %v515
          %v609 = vpack.c.bf16 %v518, %v517
          %v610 = vpack.c.bf16 %v520, %v519
          %v611 = vpack.c.bf16 %v522, %v521
          %v612 = vpack.c.bf16 %v524, %v523
          %v613 = vpack.c.bf16 %v526, %v525
          %v614 = vpack.c.bf16 %v528, %v527
          %v615 = vpack.c.bf16 %v530, %v529
          %v616 = vpack.c.bf16 %v533, %v532
          %v617 = vpack.c.bf16 %v535, %v534
          %v618 = vpack.c.bf16 %v537, %v536
          %v619 = vpack.c.bf16 %v539, %v538
          %v620 = vpack.c.bf16 %v541, %v540
          %v621 = vpack.c.bf16 %v543, %v542
          %v622 = vpack.c.bf16 %v545, %v544
          %v623 = vpack.c.bf16 %v547, %v546
          %v625 = vlaneseq
          %v626 = vshrl.u32 %v625, 7
          %v627 = vsub.s32 0, %v626
          %v628 = vrot.slane %v531, %v627
          %630 = vmatprep.subr.bf16.mxu0 0
          %631 = vmatpush1.bf16.msra.mxu0 %v600
          %632 = vmatprep.subr.bf16.mxu0 0
          %633 = vmatpush1.bf16.msra.mxu0 %v601
          %634 = vmatprep.subr.bf16.mxu0 0
          %635 = vmatpush1.bf16.msra.mxu0 %v602
          %636 = vmatprep.subr.bf16.mxu0 0
          %637 = vmatpush1.bf16.msra.mxu0 %v603
          %638 = vmatprep.subr.bf16.mxu0 0
          %639 = vmatpush1.bf16.msra.mxu0 %v604
          %640 = vmatprep.subr.bf16.mxu0 0
          %641 = vmatpush1.bf16.msra.mxu0 %v605
          %642 = vmatprep.subr.bf16.mxu0 0
          %643 = vmatpush1.bf16.msra.mxu0 %v606
          %644 = vmatprep.subr.bf16.mxu0 0
          %645 = vmatpush1.bf16.msra.mxu0 %v607
          %646 = vmatprep.subr.bf16.mxu0 0
          %647 = vmatpush1.bf16.msra.mxu0 %v608
          %648 = vmatprep.subr.bf16.mxu0 0
          %649 = vmatpush1.bf16.msra.mxu0 %v609
          %650 = vmatprep.subr.bf16.mxu0 0
          %651 = vmatpush1.bf16.msra.mxu0 %v610
          %652 = vmatprep.subr.bf16.mxu0 0
          %653 = vmatpush1.bf16.msra.mxu0 %v611
          %654 = vmatprep.subr.bf16.mxu0 0
          %655 = vmatpush1.bf16.msra.mxu0 %v612
          %656 = vmatprep.subr.bf16.mxu0 0
          %657 = vmatpush1.bf16.msra.mxu0 %v613
          %658 = vmatprep.subr.bf16.mxu0 0
          %659 = vmatpush1.bf16.msra.mxu0 %v614
          %660 = vmatprep.subr.bf16.mxu0 0
          %661 = vmatpush1.bf16.msra.mxu0 %v615
          %662 = vmatprep.mubr.bf16.mxu0 %v438
          %663 = vmatmul.mubr.bf16.gmra.mrb[0].mxu0 %v437
          %v664 = vpop.f32.mrb[0].mxu0
          %v665 = vadd.f32 %v628, %v664
          %v666 = vpop.f32.mrb[0].mxu0
          %v667 = vpop.f32.mrb[0].mxu0
          %v668 = vpop.f32.mrb[0].mxu0
          %669 = vdwg.mxu0
          %v670 = vmax.f32 %v665, 0.0
          %v671 = vpack.c.bf16 %v670, %v670
          %v673 = vlaneseq
          %v674 = vshrl.u32 %v673, 7
          %v675 = vsub.s32 0, %v674
          %v676 = vrot.slane %v548, %v675
          %678 = vmatprep.subr.bf16.mxu0 0
          %679 = vmatpush1.bf16.msra.mxu0 %v616
          %680 = vmatprep.subr.bf16.mxu0 0
          %681 = vmatpush1.bf16.msra.mxu0 %v617
          %682 = vmatprep.subr.bf16.mxu0 0
          %683 = vmatpush1.bf16.msra.mxu0 %v618
          %684 = vmatprep.subr.bf16.mxu0 0
          %685 = vmatpush1.bf16.msra.mxu0 %v619
          %686 = vmatprep.subr.bf16.mxu0 0
          %687 = vmatpush1.bf16.msra.mxu0 %v620
          %688 = vmatprep.subr.bf16.mxu0 0
          %689 = vmatpush1.bf16.msra.mxu0 %v621
          %690 = vmatprep.subr.bf16.mxu0 0
          %691 = vmatpush1.bf16.msra.mxu0 %v622
          %692 = vmatprep.subr.bf16.mxu0 0
          %693 = vmatpush1.bf16.msra.mxu0 %v623
          %694 = vmatprep.subr.bf16.mxu0 0
          %695 = vmatpush1.bf16.msra.mxu0 0
          %696 = vmatprep.subr.bf16.mxu0 0
          %697 = vmatpush1.bf16.msra.mxu0 0
          %698 = vmatprep.subr.bf16.mxu0 0
          %699 = vmatpush1.bf16.msra.mxu0 0
          %700 = vmatprep.subr.bf16.mxu0 0
          %701 = vmatpush1.bf16.msra.mxu0 0
          %702 = vmatprep.subr.bf16.mxu0 0
          %703 = vmatpush1.bf16.msra.mxu0 0
          %704 = vmatprep.subr.bf16.mxu0 0
          %705 = vmatpush1.bf16.msra.mxu0 0
          %706 = vmatprep.subr.bf16.mxu0 0
          %707 = vmatpush1.bf16.msra.mxu0 0
          %708 = vmatprep.subr.bf16.mxu0 0
          %709 = vmatpush1.bf16.msra.mxu0 0
          %710 = vmatprep.mubr.bf16.mxu0 0
          %711 = vmatmul.mubr.bf16.gmra.mrb[0].mxu0 %v671
          %v712 = vpop.f32.mrb[0].mxu0
          %v713 = vadd.f32 %v676, %v712
          %v714 = vpop.f32.mrb[0].mxu0
          %v715 = vpop.f32.mrb[0].mxu0
          %v716 = vpop.f32.mrb[0].mxu0
          %717 = vdwg.mxu0
          %v718 = vsel %vm492, 1, 0
          %vm719 = vcmp.eq.s32.totalorder %v718, 1
          %v720 = vsel %vm719, %v713, -1e+30
          %721 = vmax.xlane.f32.xlu0 %v720
          %v722 = vpop.xlane.xlu0 %721
          %v723 = vsub.f32 %v720, %v722
          %v724 = vmul.f32 %v723, 1.442695
          %v725 = vpow.pop %v724
          %726 = vadd.xlane.f32.xlu0 %v725
          %v727 = vpop.xlane.xlu0 %726
          %v728 = vlog2.pop %v727
          %v729 = vmul.f32 %v728, 0.6931472
          %v730 = vsub.f32 %v723, %v729
          %v731 = vmul.f32 %v730, 1.442695
          %v732 = vpow.pop %v731
          %v733 = vmul.f32 %v439, %v730
          %v734 = vsub.f32 0.0, %v733
          %735 = vadd.xlane.f32.xlu0 %v734
          %v736 = vpop.xlane.xlu0 %735
          %v737 = vrot.slane %v736, 4
          %v738 = vadd.f32 %v736, %v737
          %v739 = vrot.slane %v738, 2
          %v740 = vadd.f32 %v738, %v739
          %v741 = vrot.slane %v740, 1
          %v742 = vadd.f32 %v740, %v741
          %v743 = vmul.f32 %v742, 0.125
          %v744 = vlaneseq
          %v745 = vshrl.u32 %v744, 7
          %v746 = vstv %s494
          %vm747 = vcmp.eq.s32.totalorder %v745, %v746
          %v748 = vsel %vm747, %v743, 0.0
          %v749 = vadd.f32 %v599, %v748
          %v750 = vsub.f32 %v732, %v439
          %v751 = vmul.f32 %v750, 0.125
          %v752 = vpack.c.bf16 %v751, %v751
          %v753 = vrot.slane %v751, 4
          %v754 = vadd.f32 %v751, %v753
          %v755 = vrot.slane %v754, 2
          %v756 = vadd.f32 %v754, %v755
          %v757 = vrot.slane %v756, 1
          %v758 = vadd.f32 %v756, %v757
          %759 = vmatprep.subr.bf16.mxu0 0
          %760 = vmatpush1.bf16.xpose.msra.mxu0 %v616
          %761 = vmatprep.subr.bf16.mxu0 0
          %762 = vmatpush1.bf16.xpose.msra.mxu0 %v617
          %763 = vmatprep.subr.bf16.mxu0 0
          %764 = vmatpush1.bf16.xpose.msra.mxu0 %v618
          %765 = vmatprep.subr.bf16.mxu0 0
          %766 = vmatpush1.bf16.xpose.msra.mxu0 %v619
          %767 = vmatprep.subr.bf16.mxu0 0
          %768 = vmatpush1.bf16.xpose.msra.mxu0 %v620
          %769 = vmatprep.subr.bf16.mxu0 0
          %770 = vmatpush1.bf16.xpose.msra.mxu0 %v621
          %771 = vmatprep.subr.bf16.mxu0 0
          %772 = vmatpush1.bf16.xpose.msra.mxu0 %v622
          %773 = vmatprep.subr.bf16.mxu0 0
          %774 = vmatpush1.bf16.xpose.msra.mxu0 %v623
          %775 = vmatprep.subr.bf16.mxu0 0
          %776 = vmatpush1.bf16.xpose.msra.mxu0 0
          %777 = vmatprep.subr.bf16.mxu0 0
          %778 = vmatpush1.bf16.xpose.msra.mxu0 0
          %779 = vmatprep.subr.bf16.mxu0 0
          %780 = vmatpush1.bf16.xpose.msra.mxu0 0
          %781 = vmatprep.subr.bf16.mxu0 0
          %782 = vmatpush1.bf16.xpose.msra.mxu0 0
          %783 = vmatprep.subr.bf16.mxu0 0
          %784 = vmatpush1.bf16.xpose.msra.mxu0 0
          %785 = vmatprep.subr.bf16.mxu0 0
          %786 = vmatpush1.bf16.xpose.msra.mxu0 0
          %787 = vmatprep.subr.bf16.mxu0 0
          %788 = vmatpush1.bf16.xpose.msra.mxu0 0
          %789 = vmatprep.subr.bf16.mxu0 0
          %790 = vmatpush1.bf16.xpose.msra.mxu0 0
          %791 = vmatprep.mubr.bf16.mxu0 0
          %792 = vmatmul.mubr.bf16.gmra.mrb[0].mxu0 %v752
          %v793 = vpop.f32.mrb[0].mxu0
          %v794 = vadd.f32 0.0, %v793
          %v795 = vpop.f32.mrb[0].mxu0
          %v796 = vpop.f32.mrb[0].mxu0
          %v797 = vpop.f32.mrb[0].mxu0
          %798 = vdwg.mxu0
          %vm799 = vcmp.gt.f32.partialorder %v665, 0.0
          %v800 = vsel %vm799, %v794, 0.0
          %v801 = vpack.c.bf16 %v800, %v800
          %v802 = vrot.slane %v800, 4
          %v803 = vadd.f32 %v800, %v802
          %v804 = vrot.slane %v803, 2
          %v805 = vadd.f32 %v803, %v804
          %v806 = vrot.slane %v805, 1
          %v807 = vadd.f32 %v805, %v806
          %v808 = vmul.f32 %v499, 0.0005
          %v809 = vmul.f32 %v500, 0.0005
          %v810 = vmul.f32 %v501, 0.0005
          %v811 = vmul.f32 %v502, 0.0005
          %v812 = vmul.f32 %v503, 0.0005
          %v813 = vmul.f32 %v504, 0.0005
          %v814 = vmul.f32 %v505, 0.0005
          %v815 = vmul.f32 %v506, 0.0005
          %v816 = vmul.f32 %v507, 0.0005
          %v817 = vmul.f32 %v508, 0.0005
          %v818 = vmul.f32 %v509, 0.0005
          %v819 = vmul.f32 %v510, 0.0005
          %v820 = vmul.f32 %v511, 0.0005
          %v821 = vmul.f32 %v512, 0.0005
          %v822 = vmul.f32 %v513, 0.0005
          %v823 = vmul.f32 %v514, 0.0005
          %v824 = vmul.f32 %v515, 0.0005
          %v825 = vmul.f32 %v516, 0.0005
          %v826 = vmul.f32 %v517, 0.0005
          %v827 = vmul.f32 %v518, 0.0005
          %v828 = vmul.f32 %v519, 0.0005
          %v829 = vmul.f32 %v520, 0.0005
          %v830 = vmul.f32 %v521, 0.0005
          %v831 = vmul.f32 %v522, 0.0005
          %v832 = vmul.f32 %v523, 0.0005
          %v833 = vmul.f32 %v524, 0.0005
          %v834 = vmul.f32 %v525, 0.0005
          %v835 = vmul.f32 %v526, 0.0005
          %v836 = vmul.f32 %v527, 0.0005
          %v837 = vmul.f32 %v528, 0.0005
          %v838 = vmul.f32 %v529, 0.0005
          %v839 = vmul.f32 %v530, 0.0005
          %840 = vxpose.xlu0.c.b16.start [1/8] %v437, 128
          %841 = vxpose.xlu0.c.b16.cont [2/8] 0, 128
          %842 = vxpose.xlu0.c.b16.cont [3/8] 0, 128
          %843 = vxpose.xlu0.c.b16.cont [4/8] 0, 128
          %844 = vxpose.xlu0.c.b16.cont [5/8] 0, 128
          %845 = vxpose.xlu0.c.b16.cont [6/8] 0, 128
          %846 = vxpose.xlu0.c.b16.cont [7/8] 0, 128
          %847 = vxpose.xlu0.c.b16.end [8/8] 0, 128
          %v848 = vpop.trf.xlu0
          %v849 = vpop.trf.xlu0
          %v850 = vpop.trf.xlu0
          %v851 = vpop.trf.xlu0
          %v852 = vpop.trf.xlu0
          %v853 = vpop.trf.xlu0
          %v854 = vpop.trf.xlu0
          %v855 = vpop.trf.xlu0
          %856 = vxpose.xlu0.c.b16.start [1/8] %v438, 128
          %857 = vxpose.xlu0.c.b16.cont [2/8] 0, 128
          %858 = vxpose.xlu0.c.b16.cont [3/8] 0, 128
          %859 = vxpose.xlu0.c.b16.cont [4/8] 0, 128
          %860 = vxpose.xlu0.c.b16.cont [5/8] 0, 128
          %861 = vxpose.xlu0.c.b16.cont [6/8] 0, 128
          %862 = vxpose.xlu0.c.b16.cont [7/8] 0, 128
          %863 = vxpose.xlu0.c.b16.end [8/8] 0, 128
          %v864 = vpop.trf.xlu0
          %v865 = vpop.trf.xlu0
          %v866 = vpop.trf.xlu0
          %v867 = vpop.trf.xlu0
          %v868 = vpop.trf.xlu0
          %v869 = vpop.trf.xlu0
          %v870 = vpop.trf.xlu0
          %v871 = vpop.trf.xlu0
          %vm872 = vcmask 64512
          %v874 = vsel %vm872, %v848, 0
          %v877 = vsel %vm872, %v849, 0
          %v880 = vsel %vm872, %v850, 0
          %v883 = vsel %vm872, %v851, 0
          %v886 = vsel %vm872, %v852, 0
          %v889 = vsel %vm872, %v853, 0
          %v892 = vsel %vm872, %v854, 0
          %v895 = vsel %vm872, %v855, 0
          %v898 = vsel %vm872, %v864, 0
          %v901 = vsel %vm872, %v865, 0
          %v904 = vsel %vm872, %v866, 0
          %v907 = vsel %vm872, %v867, 0
          %v910 = vsel %vm872, %v868, 0
          %v913 = vsel %vm872, %v869, 0
          %v916 = vsel %vm872, %v870, 0
          %v919 = vsel %vm872, %v871, 0
          %vm921 = vcmask 1043456
          %v923 = vsel %vm921, %v801, 0
          %925 = vmatprep.subr.bf16.mxu0 0
          %926 = vmatpush1.bf16.msra.mxu0 %v923
          %927 = vmatprep.subr.bf16.mxu0 0
          %928 = vmatpush1.bf16.msra.mxu0 0
          %929 = vmatprep.subr.bf16.mxu0 0
          %930 = vmatpush1.bf16.msra.mxu0 0
          %931 = vmatprep.subr.bf16.mxu0 0
          %932 = vmatpush1.bf16.msra.mxu0 0
          %933 = vmatprep.subr.bf16.mxu0 0
          %934 = vmatpush1.bf16.msra.mxu0 0
          %935 = vmatprep.subr.bf16.mxu0 0
          %936 = vmatpush1.bf16.msra.mxu0 0
          %937 = vmatprep.subr.bf16.mxu0 0
          %938 = vmatpush1.bf16.msra.mxu0 0
          %939 = vmatprep.subr.bf16.mxu0 0
          %940 = vmatpush1.bf16.msra.mxu0 0
          %941 = vmatprep.subr.bf16.mxu0 0
          %942 = vmatpush1.bf16.msra.mxu0 0
          %943 = vmatprep.subr.bf16.mxu0 0
          %944 = vmatpush1.bf16.msra.mxu0 0
          %945 = vmatprep.subr.bf16.mxu0 0
          %946 = vmatpush1.bf16.msra.mxu0 0
          %947 = vmatprep.subr.bf16.mxu0 0
          %948 = vmatpush1.bf16.msra.mxu0 0
          %949 = vmatprep.subr.bf16.mxu0 0
          %950 = vmatpush1.bf16.msra.mxu0 0
          %951 = vmatprep.subr.bf16.mxu0 0
          %952 = vmatpush1.bf16.msra.mxu0 0
          %953 = vmatprep.subr.bf16.mxu0 0
          %954 = vmatpush1.bf16.msra.mxu0 0
          %955 = vmatprep.subr.bf16.mxu0 0
          %956 = vmatpush1.bf16.msra.mxu0 0
          %957 = vmatprep.mubr.bf16.mxu0 0
          %958 = vmatmul.mubr.bf16.gmra.mrb[0].mxu0 %v874
          %v959 = vpop.f32.mrb[0].mxu0
          %v960 = vadd.f32 %v808, %v959
          %v961 = vpop.f32.mrb[0].mxu0
          %v962 = vpop.f32.mrb[0].mxu0
          %v963 = vadd.f32 %v809, %v962
          %v964 = vpop.f32.mrb[0].mxu0
          %965 = vmatprep.mubr.bf16.mxu0 0
          %966 = vmatmul.mubr.bf16.gmra.mrb[0].mxu0 %v877
          %v967 = vpop.f32.mrb[0].mxu0
          %v968 = vadd.f32 %v810, %v967
          %v969 = vpop.f32.mrb[0].mxu0
          %v970 = vpop.f32.mrb[0].mxu0
          %v971 = vadd.f32 %v811, %v970
          %v972 = vpop.f32.mrb[0].mxu0
          %973 = vmatprep.mubr.bf16.mxu0 0
          %974 = vmatmul.mubr.bf16.gmra.mrb[0].mxu0 %v880
          %v975 = vpop.f32.mrb[0].mxu0
          %v976 = vadd.f32 %v812, %v975
          %v977 = vpop.f32.mrb[0].mxu0
          %v978 = vpop.f32.mrb[0].mxu0
          %v979 = vadd.f32 %v813, %v978
          %v980 = vpop.f32.mrb[0].mxu0
          %981 = vmatprep.mubr.bf16.mxu0 0
          %982 = vmatmul.mubr.bf16.gmra.mrb[0].mxu0 %v883
          %v983 = vpop.f32.mrb[0].mxu0
          %v984 = vadd.f32 %v814, %v983
          %v985 = vpop.f32.mrb[0].mxu0
          %v986 = vpop.f32.mrb[0].mxu0
          %v987 = vadd.f32 %v815, %v986
          %v988 = vpop.f32.mrb[0].mxu0
          %989 = vmatprep.mubr.bf16.mxu0 0
          %990 = vmatmul.mubr.bf16.gmra.mrb[0].mxu0 %v886
          %v991 = vpop.f32.mrb[0].mxu0
          %v992 = vadd.f32 %v816, %v991
          %v993 = vpop.f32.mrb[0].mxu0
          %v994 = vpop.f32.mrb[0].mxu0
          %v995 = vadd.f32 %v817, %v994
          %v996 = vpop.f32.mrb[0].mxu0
          %997 = vmatprep.mubr.bf16.mxu0 0
          %998 = vmatmul.mubr.bf16.gmra.mrb[0].mxu0 %v889
          %v999 = vpop.f32.mrb[0].mxu0
          %v1000 = vadd.f32 %v818, %v999
          %v1001 = vpop.f32.mrb[0].mxu0
          %v1002 = vpop.f32.mrb[0].mxu0
          %v1003 = vadd.f32 %v819, %v1002
          %v1004 = vpop.f32.mrb[0].mxu0
          %1005 = vmatprep.mubr.bf16.mxu0 0
          %1006 = vmatmul.mubr.bf16.gmra.mrb[0].mxu0 %v892
          %v1007 = vpop.f32.mrb[0].mxu0
          %v1008 = vadd.f32 %v820, %v1007
          %v1009 = vpop.f32.mrb[0].mxu0
          %v1010 = vpop.f32.mrb[0].mxu0
          %v1011 = vadd.f32 %v821, %v1010
          %v1012 = vpop.f32.mrb[0].mxu0
          %1013 = vmatprep.mubr.bf16.mxu0 0
          %1014 = vmatmul.mubr.bf16.gmra.mrb[0].mxu0 %v895
          %v1015 = vpop.f32.mrb[0].mxu0
          %v1016 = vadd.f32 %v822, %v1015
          %v1017 = vpop.f32.mrb[0].mxu0
          %v1018 = vpop.f32.mrb[0].mxu0
          %v1019 = vadd.f32 %v823, %v1018
          %v1020 = vpop.f32.mrb[0].mxu0
          %1021 = vmatprep.mubr.bf16.mxu0 0
          %1022 = vmatmul.mubr.bf16.gmra.mrb[0].mxu0 %v898
          %v1023 = vpop.f32.mrb[0].mxu0
          %v1024 = vadd.f32 %v824, %v1023
          %v1025 = vpop.f32.mrb[0].mxu0
          %v1026 = vpop.f32.mrb[0].mxu0
          %v1027 = vadd.f32 %v825, %v1026
          %v1028 = vpop.f32.mrb[0].mxu0
          %1029 = vmatprep.mubr.bf16.mxu0 0
          %1030 = vmatmul.mubr.bf16.gmra.mrb[0].mxu0 %v901
          %v1031 = vpop.f32.mrb[0].mxu0
          %v1032 = vadd.f32 %v826, %v1031
          %v1033 = vpop.f32.mrb[0].mxu0
          %v1034 = vpop.f32.mrb[0].mxu0
          %v1035 = vadd.f32 %v827, %v1034
          %v1036 = vpop.f32.mrb[0].mxu0
          %1037 = vmatprep.mubr.bf16.mxu0 0
          %1038 = vmatmul.mubr.bf16.gmra.mrb[0].mxu0 %v904
          %v1039 = vpop.f32.mrb[0].mxu0
          %v1040 = vadd.f32 %v828, %v1039
          %v1041 = vpop.f32.mrb[0].mxu0
          %v1042 = vpop.f32.mrb[0].mxu0
          %v1043 = vadd.f32 %v829, %v1042
          %v1044 = vpop.f32.mrb[0].mxu0
          %1045 = vmatprep.mubr.bf16.mxu0 0
          %1046 = vmatmul.mubr.bf16.gmra.mrb[0].mxu0 %v907
          %v1047 = vpop.f32.mrb[0].mxu0
          %v1048 = vadd.f32 %v830, %v1047
          %v1049 = vpop.f32.mrb[0].mxu0
          %v1050 = vpop.f32.mrb[0].mxu0
          %v1051 = vadd.f32 %v831, %v1050
          %v1052 = vpop.f32.mrb[0].mxu0
          %1053 = vmatprep.mubr.bf16.mxu0 0
          %1054 = vmatmul.mubr.bf16.gmra.mrb[0].mxu0 %v910
          %v1055 = vpop.f32.mrb[0].mxu0
          %v1056 = vadd.f32 %v832, %v1055
          %v1057 = vpop.f32.mrb[0].mxu0
          %v1058 = vpop.f32.mrb[0].mxu0
          %v1059 = vadd.f32 %v833, %v1058
          %v1060 = vpop.f32.mrb[0].mxu0
          %1061 = vmatprep.mubr.bf16.mxu0 0
          %1062 = vmatmul.mubr.bf16.gmra.mrb[0].mxu0 %v913
          %v1063 = vpop.f32.mrb[0].mxu0
          %v1064 = vadd.f32 %v834, %v1063
          %v1065 = vpop.f32.mrb[0].mxu0
          %v1066 = vpop.f32.mrb[0].mxu0
          %v1067 = vadd.f32 %v835, %v1066
          %v1068 = vpop.f32.mrb[0].mxu0
          %1069 = vmatprep.mubr.bf16.mxu0 0
          %1070 = vmatmul.mubr.bf16.gmra.mrb[0].mxu0 %v916
          %v1071 = vpop.f32.mrb[0].mxu0
          %v1072 = vadd.f32 %v836, %v1071
          %v1073 = vpop.f32.mrb[0].mxu0
          %v1074 = vpop.f32.mrb[0].mxu0
          %v1075 = vadd.f32 %v837, %v1074
          %v1076 = vpop.f32.mrb[0].mxu0
          %1077 = vmatprep.mubr.bf16.mxu0 0
          %1078 = vmatmul.mubr.bf16.gmra.mrb[0].mxu0 %v919
          %v1079 = vpop.f32.mrb[0].mxu0
          %v1080 = vadd.f32 %v838, %v1079
          %v1081 = vpop.f32.mrb[0].mxu0
          %v1082 = vpop.f32.mrb[0].mxu0
          %v1083 = vadd.f32 %v839, %v1082
          %v1084 = vpop.f32.mrb[0].mxu0
          %1085 = vdwg.mxu0
          %v1086 = vmul.f32 %v549, 0.9
          %v1087 = vmul.f32 %v550, 0.9
          %v1088 = vmul.f32 %v551, 0.9
          %v1089 = vmul.f32 %v552, 0.9
          %v1090 = vmul.f32 %v553, 0.9
          %v1091 = vmul.f32 %v554, 0.9
          %v1092 = vmul.f32 %v555, 0.9
          %v1093 = vmul.f32 %v556, 0.9
          %v1094 = vmul.f32 %v557, 0.9
          %v1095 = vmul.f32 %v558, 0.9
          %v1096 = vmul.f32 %v559, 0.9
          %v1097 = vmul.f32 %v560, 0.9
          %v1098 = vmul.f32 %v561, 0.9
          %v1099 = vmul.f32 %v562, 0.9
          %v1100 = vmul.f32 %v563, 0.9
          %v1101 = vmul.f32 %v564, 0.9
          %v1102 = vmul.f32 %v565, 0.9
          %v1103 = vmul.f32 %v566, 0.9
          %v1104 = vmul.f32 %v567, 0.9
          %v1105 = vmul.f32 %v568, 0.9
          %v1106 = vmul.f32 %v569, 0.9
          %v1107 = vmul.f32 %v570, 0.9
          %v1108 = vmul.f32 %v571, 0.9
          %v1109 = vmul.f32 %v572, 0.9
          %v1110 = vmul.f32 %v573, 0.9
          %v1111 = vmul.f32 %v574, 0.9
          %v1112 = vmul.f32 %v575, 0.9
          %v1113 = vmul.f32 %v576, 0.9
          %v1114 = vmul.f32 %v577, 0.9
          %v1115 = vmul.f32 %v578, 0.9
          %v1116 = vmul.f32 %v579, 0.9
          %v1117 = vmul.f32 %v580, 0.9
          %v1118 = vadd.f32 %v960, %v1086
          %v1119 = vadd.f32 %v963, %v1087
          %v1120 = vadd.f32 %v968, %v1088
          %v1121 = vadd.f32 %v971, %v1089
          %v1122 = vadd.f32 %v976, %v1090
          %v1123 = vadd.f32 %v979, %v1091
          %v1124 = vadd.f32 %v984, %v1092
          %v1125 = vadd.f32 %v987, %v1093
          %v1126 = vadd.f32 %v992, %v1094
          %v1127 = vadd.f32 %v995, %v1095
          %v1128 = vadd.f32 %v1000, %v1096
          %v1129 = vadd.f32 %v1003, %v1097
          %v1130 = vadd.f32 %v1008, %v1098
          %v1131 = vadd.f32 %v1011, %v1099
          %v1132 = vadd.f32 %v1016, %v1100
          %v1133 = vadd.f32 %v1019, %v1101
          %v1134 = vadd.f32 %v1024, %v1102
          %v1135 = vadd.f32 %v1027, %v1103
          %v1136 = vadd.f32 %v1032, %v1104
          %v1137 = vadd.f32 %v1035, %v1105
          %v1138 = vadd.f32 %v1040, %v1106
          %v1139 = vadd.f32 %v1043, %v1107
          %v1140 = vadd.f32 %v1048, %v1108
          %v1141 = vadd.f32 %v1051, %v1109
          %v1142 = vadd.f32 %v1056, %v1110
          %v1143 = vadd.f32 %v1059, %v1111
          %v1144 = vadd.f32 %v1064, %v1112
          %v1145 = vadd.f32 %v1067, %v1113
          %v1146 = vadd.f32 %v1072, %v1114
          %v1147 = vadd.f32 %v1075, %v1115
          %v1148 = vadd.f32 %v1080, %v1116
          %v1149 = vadd.f32 %v1083, %v1117
          %v1150 = vmul.f32 %v1118, 0.01
          %v1151 = vmul.f32 %v1119, 0.01
          %v1152 = vmul.f32 %v1120, 0.01
          %v1153 = vmul.f32 %v1121, 0.01
          %v1154 = vmul.f32 %v1122, 0.01
          %v1155 = vmul.f32 %v1123, 0.01
          %v1156 = vmul.f32 %v1124, 0.01
          %v1157 = vmul.f32 %v1125, 0.01
          %v1158 = vmul.f32 %v1126, 0.01
          %v1159 = vmul.f32 %v1127, 0.01
          %v1160 = vmul.f32 %v1128, 0.01
          %v1161 = vmul.f32 %v1129, 0.01
          %v1162 = vmul.f32 %v1130, 0.01
          %v1163 = vmul.f32 %v1131, 0.01
          %v1164 = vmul.f32 %v1132, 0.01
          %v1165 = vmul.f32 %v1133, 0.01
          %v1166 = vmul.f32 %v1134, 0.01
          %v1167 = vmul.f32 %v1135, 0.01
          %v1168 = vmul.f32 %v1136, 0.01
          %v1169 = vmul.f32 %v1137, 0.01
          %v1170 = vmul.f32 %v1138, 0.01
          %v1171 = vmul.f32 %v1139, 0.01
          %v1172 = vmul.f32 %v1140, 0.01
          %v1173 = vmul.f32 %v1141, 0.01
          %v1174 = vmul.f32 %v1142, 0.01
          %v1175 = vmul.f32 %v1143, 0.01
          %v1176 = vmul.f32 %v1144, 0.01
          %v1177 = vmul.f32 %v1145, 0.01
          %v1178 = vmul.f32 %v1146, 0.01
          %v1179 = vmul.f32 %v1147, 0.01
          %v1180 = vmul.f32 %v1148, 0.01
          %v1181 = vmul.f32 %v1149, 0.01
          %v1182 = vsub.f32 %v499, %v1150
          %v1183 = vsub.f32 %v500, %v1151
          %v1184 = vsub.f32 %v501, %v1152
          %v1185 = vsub.f32 %v502, %v1153
          %v1186 = vsub.f32 %v503, %v1154
          %v1187 = vsub.f32 %v504, %v1155
          %v1188 = vsub.f32 %v505, %v1156
          %v1189 = vsub.f32 %v506, %v1157
          %v1190 = vsub.f32 %v507, %v1158
          %v1191 = vsub.f32 %v508, %v1159
          %v1192 = vsub.f32 %v509, %v1160
          %v1193 = vsub.f32 %v510, %v1161
          %v1194 = vsub.f32 %v511, %v1162
          %v1195 = vsub.f32 %v512, %v1163
          %v1196 = vsub.f32 %v513, %v1164
          %v1197 = vsub.f32 %v514, %v1165
          %v1198 = vsub.f32 %v515, %v1166
          %v1199 = vsub.f32 %v516, %v1167
          %v1200 = vsub.f32 %v517, %v1168
          %v1201 = vsub.f32 %v518, %v1169
          %v1202 = vsub.f32 %v519, %v1170
          %v1203 = vsub.f32 %v520, %v1171
          %v1204 = vsub.f32 %v521, %v1172
          %v1205 = vsub.f32 %v522, %v1173
          %v1206 = vsub.f32 %v523, %v1174
          %v1207 = vsub.f32 %v524, %v1175
          %v1208 = vsub.f32 %v525, %v1176
          %v1209 = vsub.f32 %v526, %v1177
          %v1210 = vsub.f32 %v527, %v1178
          %v1211 = vsub.f32 %v528, %v1179
          %v1212 = vsub.f32 %v529, %v1180
          %v1213 = vsub.f32 %v530, %v1181
          %v1214 = vmul.f32 %v531, 0.0005
          %v1215 = vadd.f32 %v807, %v1214
          %v1216 = vmul.f32 %v581, 0.9
          %v1217 = vadd.f32 %v1215, %v1216
          %v1218 = vmul.f32 %v1217, 0.01
          %v1219 = vsub.f32 %v531, %v1218
          %v1220 = vmul.f32 %v532, 0.0005
          %v1221 = vmul.f32 %v533, 0.0005
          %v1222 = vmul.f32 %v534, 0.0005
          %v1223 = vmul.f32 %v535, 0.0005
          %v1224 = vmul.f32 %v536, 0.0005
          %v1225 = vmul.f32 %v537, 0.0005
          %v1226 = vmul.f32 %v538, 0.0005
          %v1227 = vmul.f32 %v539, 0.0005
          %v1228 = vmul.f32 %v540, 0.0005
          %v1229 = vmul.f32 %v541, 0.0005
          %v1230 = vmul.f32 %v542, 0.0005
          %v1231 = vmul.f32 %v543, 0.0005
          %v1232 = vmul.f32 %v544, 0.0005
          %v1233 = vmul.f32 %v545, 0.0005
          %v1234 = vmul.f32 %v546, 0.0005
          %v1235 = vmul.f32 %v547, 0.0005
          %1236 = vxpose.xlu0.c.b16.start [1/8] %v671, 128
          %1237 = vxpose.xlu0.c.b16.cont [2/8] 0, 128
          %1238 = vxpose.xlu0.c.b16.cont [3/8] 0, 128
          %1239 = vxpose.xlu0.c.b16.cont [4/8] 0, 128
          %1240 = vxpose.xlu0.c.b16.cont [5/8] 0, 128
          %1241 = vxpose.xlu0.c.b16.cont [6/8] 0, 128
          %1242 = vxpose.xlu0.c.b16.cont [7/8] 0, 128
          %1243 = vxpose.xlu0.c.b16.end [8/8] 0, 128
          %v1244 = vpop.trf.xlu0
          %v1245 = vpop.trf.xlu0
          %v1246 = vpop.trf.xlu0
          %v1247 = vpop.trf.xlu0
          %v1248 = vpop.trf.xlu0
          %v1249 = vpop.trf.xlu0
          %v1250 = vpop.trf.xlu0
          %v1251 = vpop.trf.xlu0
          %v1253 = vsel %vm872, %v1244, 0
          %v1256 = vsel %vm872, %v1245, 0
          %v1259 = vsel %vm872, %v1246, 0
          %v1262 = vsel %vm872, %v1247, 0
          %v1265 = vsel %vm872, %v1248, 0
          %v1268 = vsel %vm872, %v1249, 0
          %v1271 = vsel %vm872, %v1250, 0
          %v1274 = vsel %vm872, %v1251, 0
          %v1277 = vsel %vm921, %v752, 0
          %1279 = vmatprep.subr.bf16.mxu0 0
          %1280 = vmatpush1.bf16.msra.mxu0 %v1277
          %1281 = vmatprep.subr.bf16.mxu0 0
          %1282 = vmatpush1.bf16.msra.mxu0 0
          %1283 = vmatprep.subr.bf16.mxu0 0
          %1284 = vmatpush1.bf16.msra.mxu0 0
          %1285 = vmatprep.subr.bf16.mxu0 0
          %1286 = vmatpush1.bf16.msra.mxu0 0
          %1287 = vmatprep.subr.bf16.mxu0 0
          %1288 = vmatpush1.bf16.msra.mxu0 0
          %1289 = vmatprep.subr.bf16.mxu0 0
          %1290 = vmatpush1.bf16.msra.mxu0 0
          %1291 = vmatprep.subr.bf16.mxu0 0
          %1292 = vmatpush1.bf16.msra.mxu0 0
          %1293 = vmatprep.subr.bf16.mxu0 0
          %1294 = vmatpush1.bf16.msra.mxu0 0
          %1295 = vmatprep.subr.bf16.mxu0 0
          %1296 = vmatpush1.bf16.msra.mxu0 0
          %1297 = vmatprep.subr.bf16.mxu0 0
          %1298 = vmatpush1.bf16.msra.mxu0 0
          %1299 = vmatprep.subr.bf16.mxu0 0
          %1300 = vmatpush1.bf16.msra.mxu0 0
          %1301 = vmatprep.subr.bf16.mxu0 0
          %1302 = vmatpush1.bf16.msra.mxu0 0
          %1303 = vmatprep.subr.bf16.mxu0 0
          %1304 = vmatpush1.bf16.msra.mxu0 0
          %1305 = vmatprep.subr.bf16.mxu0 0
          %1306 = vmatpush1.bf16.msra.mxu0 0
          %1307 = vmatprep.subr.bf16.mxu0 0
          %1308 = vmatpush1.bf16.msra.mxu0 0
          %1309 = vmatprep.subr.bf16.mxu0 0
          %1310 = vmatpush1.bf16.msra.mxu0 0
          %1311 = vmatprep.mubr.bf16.mxu0 0
          %1312 = vmatmul.mubr.bf16.gmra.mrb[0].mxu0 %v1253
          %v1313 = vpop.f32.mrb[0].mxu0
          %v1314 = vadd.f32 %v1220, %v1313
          %v1315 = vpop.f32.mrb[0].mxu0
          %v1316 = vpop.f32.mrb[0].mxu0
          %v1317 = vadd.f32 %v1221, %v1316
          %v1318 = vpop.f32.mrb[0].mxu0
          %1319 = vmatprep.mubr.bf16.mxu0 0
          %1320 = vmatmul.mubr.bf16.gmra.mrb[0].mxu0 %v1256
          %v1321 = vpop.f32.mrb[0].mxu0
          %v1322 = vadd.f32 %v1222, %v1321
          %v1323 = vpop.f32.mrb[0].mxu0
          %v1324 = vpop.f32.mrb[0].mxu0
          %v1325 = vadd.f32 %v1223, %v1324
          %v1326 = vpop.f32.mrb[0].mxu0
          %1327 = vmatprep.mubr.bf16.mxu0 0
          %1328 = vmatmul.mubr.bf16.gmra.mrb[0].mxu0 %v1259
          %v1329 = vpop.f32.mrb[0].mxu0
          %v1330 = vadd.f32 %v1224, %v1329
          %v1331 = vpop.f32.mrb[0].mxu0
          %v1332 = vpop.f32.mrb[0].mxu0
          %v1333 = vadd.f32 %v1225, %v1332
          %v1334 = vpop.f32.mrb[0].mxu0
          %1335 = vmatprep.mubr.bf16.mxu0 0
          %1336 = vmatmul.mubr.bf16.gmra.mrb[0].mxu0 %v1262
          %v1337 = vpop.f32.mrb[0].mxu0
          %v1338 = vadd.f32 %v1226, %v1337
          %v1339 = vpop.f32.mrb[0].mxu0
          %v1340 = vpop.f32.mrb[0].mxu0
          %v1341 = vadd.f32 %v1227, %v1340
          %v1342 = vpop.f32.mrb[0].mxu0
          %1343 = vmatprep.mubr.bf16.mxu0 0
          %1344 = vmatmul.mubr.bf16.gmra.mrb[0].mxu0 %v1265
          %v1345 = vpop.f32.mrb[0].mxu0
          %v1346 = vadd.f32 %v1228, %v1345
          %v1347 = vpop.f32.mrb[0].mxu0
          %v1348 = vpop.f32.mrb[0].mxu0
          %v1349 = vadd.f32 %v1229, %v1348
          %v1350 = vpop.f32.mrb[0].mxu0
          %1351 = vmatprep.mubr.bf16.mxu0 0
          %1352 = vmatmul.mubr.bf16.gmra.mrb[0].mxu0 %v1268
          %v1353 = vpop.f32.mrb[0].mxu0
          %v1354 = vadd.f32 %v1230, %v1353
          %v1355 = vpop.f32.mrb[0].mxu0
          %v1356 = vpop.f32.mrb[0].mxu0
          %v1357 = vadd.f32 %v1231, %v1356
          %v1358 = vpop.f32.mrb[0].mxu0
          %1359 = vmatprep.mubr.bf16.mxu0 0
          %1360 = vmatmul.mubr.bf16.gmra.mrb[0].mxu0 %v1271
          %v1361 = vpop.f32.mrb[0].mxu0
          %v1362 = vadd.f32 %v1232, %v1361
          %v1363 = vpop.f32.mrb[0].mxu0
          %v1364 = vpop.f32.mrb[0].mxu0
          %v1365 = vadd.f32 %v1233, %v1364
          %v1366 = vpop.f32.mrb[0].mxu0
          %1367 = vmatprep.mubr.bf16.mxu0 0
          %1368 = vmatmul.mubr.bf16.gmra.mrb[0].mxu0 %v1274
          %v1369 = vpop.f32.mrb[0].mxu0
          %v1370 = vadd.f32 %v1234, %v1369
          %v1371 = vpop.f32.mrb[0].mxu0
          %v1372 = vpop.f32.mrb[0].mxu0
          %v1373 = vadd.f32 %v1235, %v1372
          %v1374 = vpop.f32.mrb[0].mxu0
          %1375 = vdwg.mxu0
          %v1376 = vmul.f32 %v582, 0.9
          %v1377 = vmul.f32 %v583, 0.9
          %v1378 = vmul.f32 %v584, 0.9
          %v1379 = vmul.f32 %v585, 0.9
          %v1380 = vmul.f32 %v586, 0.9
          %v1381 = vmul.f32 %v587, 0.9
          %v1382 = vmul.f32 %v588, 0.9
          %v1383 = vmul.f32 %v589, 0.9
          %v1384 = vmul.f32 %v590, 0.9
          %v1385 = vmul.f32 %v591, 0.9
          %v1386 = vmul.f32 %v592, 0.9
          %v1387 = vmul.f32 %v593, 0.9
          %v1388 = vmul.f32 %v594, 0.9
          %v1389 = vmul.f32 %v595, 0.9
          %v1390 = vmul.f32 %v596, 0.9
          %v1391 = vmul.f32 %v597, 0.9
          %v1392 = vadd.f32 %v1314, %v1376
          %v1393 = vadd.f32 %v1317, %v1377
          %v1394 = vadd.f32 %v1322, %v1378
          %v1395 = vadd.f32 %v1325, %v1379
          %v1396 = vadd.f32 %v1330, %v1380
          %v1397 = vadd.f32 %v1333, %v1381
          %v1398 = vadd.f32 %v1338, %v1382
          %v1399 = vadd.f32 %v1341, %v1383
          %v1400 = vadd.f32 %v1346, %v1384
          %v1401 = vadd.f32 %v1349, %v1385
          %v1402 = vadd.f32 %v1354, %v1386
          %v1403 = vadd.f32 %v1357, %v1387
          %v1404 = vadd.f32 %v1362, %v1388
          %v1405 = vadd.f32 %v1365, %v1389
          %v1406 = vadd.f32 %v1370, %v1390
          %v1407 = vadd.f32 %v1373, %v1391
          %v1408 = vmul.f32 %v1392, 0.05
          %v1409 = vmul.f32 %v1393, 0.05
          %v1410 = vmul.f32 %v1394, 0.05
          %v1411 = vmul.f32 %v1395, 0.05
          %v1412 = vmul.f32 %v1396, 0.05
          %v1413 = vmul.f32 %v1397, 0.05
          %v1414 = vmul.f32 %v1398, 0.05
          %v1415 = vmul.f32 %v1399, 0.05
          %v1416 = vmul.f32 %v1400, 0.05
          %v1417 = vmul.f32 %v1401, 0.05
          %v1418 = vmul.f32 %v1402, 0.05
          %v1419 = vmul.f32 %v1403, 0.05
          %v1420 = vmul.f32 %v1404, 0.05
          %v1421 = vmul.f32 %v1405, 0.05
          %v1422 = vmul.f32 %v1406, 0.05
          %v1423 = vmul.f32 %v1407, 0.05
          %v1424 = vsub.f32 %v532, %v1408
          %v1425 = vsub.f32 %v533, %v1409
          %v1426 = vsub.f32 %v534, %v1410
          %v1427 = vsub.f32 %v535, %v1411
          %v1428 = vsub.f32 %v536, %v1412
          %v1429 = vsub.f32 %v537, %v1413
          %v1430 = vsub.f32 %v538, %v1414
          %v1431 = vsub.f32 %v539, %v1415
          %v1432 = vsub.f32 %v540, %v1416
          %v1433 = vsub.f32 %v541, %v1417
          %v1434 = vsub.f32 %v542, %v1418
          %v1435 = vsub.f32 %v543, %v1419
          %v1436 = vsub.f32 %v544, %v1420
          %v1437 = vsub.f32 %v545, %v1421
          %v1438 = vsub.f32 %v546, %v1422
          %v1439 = vsub.f32 %v547, %v1423
          %v1440 = vmul.f32 %v548, 0.0005
          %v1441 = vadd.f32 %v758, %v1440
          %v1442 = vmul.f32 %v598, 0.9
          %v1443 = vadd.f32 %v1441, %v1442
          %v1444 = vmul.f32 %v1443, 0.05
          %v1445 = vsub.f32 %v548, %v1444
        $region73: #{tpu_custom_call.1} parent=47 // loop_footer
          %s498 = sadd.s32 1, %s494
        $region74: #{tpu_custom_call.1} parent=47 // loop_footer_branch
          %493 = sbr.rel target = $region70
        $region75: #{tpu_custom_call.1} parent=47 // loop_exit
          _
        %v1446 = vld [vmem:[%s378] sm:$0xff]
        %v1447 = vld [vmem:[%s378 + $0x8] sm:$0xff]
        %v1448 = vpack.c.bf16 %v1446, %v1446
        %v1449 = vpack.c.bf16 %v1447, %v1447
        %v1450 = vpack.c.bf16 %v500, %v499
        %v1451 = vpack.c.bf16 %v502, %v501
        %v1452 = vpack.c.bf16 %v504, %v503
        %v1453 = vpack.c.bf16 %v506, %v505
        %v1454 = vpack.c.bf16 %v508, %v507
        %v1455 = vpack.c.bf16 %v510, %v509
        %v1456 = vpack.c.bf16 %v512, %v511
        %v1457 = vpack.c.bf16 %v514, %v513
        %v1458 = vpack.c.bf16 %v516, %v515
        %v1459 = vpack.c.bf16 %v518, %v517
        %v1460 = vpack.c.bf16 %v520, %v519
        %v1461 = vpack.c.bf16 %v522, %v521
        %v1462 = vpack.c.bf16 %v524, %v523
        %v1463 = vpack.c.bf16 %v526, %v525
        %v1464 = vpack.c.bf16 %v528, %v527
        %v1465 = vpack.c.bf16 %v530, %v529
        %v1466 = vpack.c.bf16 %v533, %v532
        %v1467 = vpack.c.bf16 %v535, %v534
        %v1468 = vpack.c.bf16 %v537, %v536
        %v1469 = vpack.c.bf16 %v539, %v538
        %v1470 = vpack.c.bf16 %v541, %v540
        %v1471 = vpack.c.bf16 %v543, %v542
        %v1472 = vpack.c.bf16 %v545, %v544
        %v1473 = vpack.c.bf16 %v547, %v546
        %v1475 = vlaneseq
        %v1476 = vshrl.u32 %v1475, 7
        %v1477 = vsub.s32 0, %v1476
        %v1478 = vrot.slane %v531, %v1477
        %1480 = vmatprep.subr.bf16.mxu0 0
        %1481 = vmatpush1.bf16.msra.mxu0 %v1450
        %1482 = vmatprep.subr.bf16.mxu0 0
        %1483 = vmatpush1.bf16.msra.mxu0 %v1451
        %1484 = vmatprep.subr.bf16.mxu0 0
        %1485 = vmatpush1.bf16.msra.mxu0 %v1452
        %1486 = vmatprep.subr.bf16.mxu0 0
        %1487 = vmatpush1.bf16.msra.mxu0 %v1453
        %1488 = vmatprep.subr.bf16.mxu0 0
        %1489 = vmatpush1.bf16.msra.mxu0 %v1454
        %1490 = vmatprep.subr.bf16.mxu0 0
        %1491 = vmatpush1.bf16.msra.mxu0 %v1455
        %1492 = vmatprep.subr.bf16.mxu0 0
        %1493 = vmatpush1.bf16.msra.mxu0 %v1456
        %1494 = vmatprep.subr.bf16.mxu0 0
        %1495 = vmatpush1.bf16.msra.mxu0 %v1457
        %1496 = vmatprep.subr.bf16.mxu0 0
        %1497 = vmatpush1.bf16.msra.mxu0 %v1458
        %1498 = vmatprep.subr.bf16.mxu0 0
        %1499 = vmatpush1.bf16.msra.mxu0 %v1459
        %1500 = vmatprep.subr.bf16.mxu0 0
        %1501 = vmatpush1.bf16.msra.mxu0 %v1460
        %1502 = vmatprep.subr.bf16.mxu0 0
        %1503 = vmatpush1.bf16.msra.mxu0 %v1461
        %1504 = vmatprep.subr.bf16.mxu0 0
        %1505 = vmatpush1.bf16.msra.mxu0 %v1462
        %1506 = vmatprep.subr.bf16.mxu0 0
        %1507 = vmatpush1.bf16.msra.mxu0 %v1463
        %1508 = vmatprep.subr.bf16.mxu0 0
        %1509 = vmatpush1.bf16.msra.mxu0 %v1464
        %1510 = vmatprep.subr.bf16.mxu0 0
        %1511 = vmatpush1.bf16.msra.mxu0 %v1465
        %1512 = vmatprep.mubr.bf16.mxu0 %v1449
        %1513 = vmatmul.mubr.bf16.gmra.mrb[0].mxu0 %v1448
        %v1514 = vpop.f32.mrb[0].mxu0
        %v1515 = vadd.f32 %v1478, %v1514
        %v1516 = vpop.f32.mrb[0].mxu0
        %v1517 = vpop.f32.mrb[0].mxu0
        %v1518 = vpop.f32.mrb[0].mxu0
        %1519 = vdwg.mxu0
        %v1520 = vmax.f32 %v1515, 0.0
        %v1521 = vpack.c.bf16 %v1520, %v1520
        %v1523 = vlaneseq
        %v1524 = vshrl.u32 %v1523, 7
        %v1525 = vsub.s32 0, %v1524
        %v1526 = vrot.slane %v548, %v1525
        %1528 = vmatprep.subr.bf16.mxu0 0
        %1529 = vmatpush1.bf16.msra.mxu0 %v1466
        %1530 = vmatprep.subr.bf16.mxu0 0
        %1531 = vmatpush1.bf16.msra.mxu0 %v1467
        %1532 = vmatprep.subr.bf16.mxu0 0
        %1533 = vmatpush1.bf16.msra.mxu0 %v1468
        %1534 = vmatprep.subr.bf16.mxu0 0
        %1535 = vmatpush1.bf16.msra.mxu0 %v1469
        %1536 = vmatprep.subr.bf16.mxu0 0
        %1537 = vmatpush1.bf16.msra.mxu0 %v1470
        %1538 = vmatprep.subr.bf16.mxu0 0
        %1539 = vmatpush1.bf16.msra.mxu0 %v1471
        %1540 = vmatprep.subr.bf16.mxu0 0
        %1541 = vmatpush1.bf16.msra.mxu0 %v1472
        %1542 = vmatprep.subr.bf16.mxu0 0
        %1543 = vmatpush1.bf16.msra.mxu0 %v1473
        %1544 = vmatprep.subr.bf16.mxu0 0
        %1545 = vmatpush1.bf16.msra.mxu0 0
        %1546 = vmatprep.subr.bf16.mxu0 0
        %1547 = vmatpush1.bf16.msra.mxu0 0
        %1548 = vmatprep.subr.bf16.mxu0 0
        %1549 = vmatpush1.bf16.msra.mxu0 0
        %1550 = vmatprep.subr.bf16.mxu0 0
        %1551 = vmatpush1.bf16.msra.mxu0 0
        %1552 = vmatprep.subr.bf16.mxu0 0
        %1553 = vmatpush1.bf16.msra.mxu0 0
        %1554 = vmatprep.subr.bf16.mxu0 0
        %1555 = vmatpush1.bf16.msra.mxu0 0
        %1556 = vmatprep.subr.bf16.mxu0 0
        %1557 = vmatpush1.bf16.msra.mxu0 0
        %1558 = vmatprep.subr.bf16.mxu0 0
        %1559 = vmatpush1.bf16.msra.mxu0 0
        %1560 = vmatprep.mubr.bf16.mxu0 0
        %1561 = vmatmul.mubr.bf16.gmra.mrb[0].mxu0 %v1521
        %v1562 = vpop.f32.mrb[0].mxu0
        %v1563 = vadd.f32 %v1526, %v1562
        %v1564 = vpop.f32.mrb[0].mxu0
        %v1565 = vpop.f32.mrb[0].mxu0
        %v1566 = vpop.f32.mrb[0].mxu0
        %1567 = vdwg.mxu0
        %1568 = vst [vmem:[%s426] sm:$0xff] %v1563
        %1569 = vst [vmem:[%s433] sm:$0xff] %v599
        %s1570 = sand.u32 %s203, 1
        %s1571 = scalar_lea.sflag [#allocation4], %s1570
        %s1572 = sand.u32 %s203, 1
        %s1573 = smul.addr %s1572, 8
        %s1574 = scalar_lea.vmem [#allocation11], %s1573
        %s1575 = sand.u32 %s229, 1
        %s1576 = scalar_lea.sflag [#allocation13], %s1575
        %s1577 = sand.u32 %s229, 1
        %s1578 = smul.addr %s1577, 8
        %s1579 = scalar_lea.vmem [#allocation12], %s1578
        // Predicated region
        $region76: #{tpu_custom_call.1} parent=47 // pred_check
          %p1580 = pneg %p213
        $region77: #{tpu_custom_call.1} parent=47 // pred_check_branch
          %1582 = sbr.rel (%p1580) target = $region79
        $region78: #{tpu_custom_call.1} parent=47 // pred_region
          %s1584 = ssub.s32 128, 128
          %1585 = vsyncadd %s1571, %s1584
          %s1586 = smul.addr %s33, 128
          %s1587 = scalar_lea.hbm %s7, %s1586
          %s1589 = sshll.u32 %s1574, 4
          %s1590 = int_to_ptr.vmem [resolvable:$true] %s1589
          %1592 = dma.vmem_to_hbm [thread:$0]  %s1590, 128, %s1587, %s1571
        $region79: #{tpu_custom_call.1} parent=47 // pred_fallthru
          _
        // Predicated region
        $region80: #{tpu_custom_call.1} parent=47 // pred_check
          %p1593 = pneg %p239
        $region81: #{tpu_custom_call.1} parent=47 // pred_check_branch
          %1595 = sbr.rel (%p1593) target = $region83
        $region82: #{tpu_custom_call.1} parent=47 // pred_region
          %s1597 = ssub.s32 128, 128
          %1598 = vsyncadd %s1576, %s1597
          %s1599 = smul.addr %s33, 128
          %s1600 = scalar_lea.hbm %s8, %s1599
          %s1602 = sshll.u32 %s1579, 4
          %s1603 = int_to_ptr.vmem [resolvable:$true] %s1602
          %1605 = dma.vmem_to_hbm [thread:$0]  %s1603, 128, %s1600, %s1576
        $region83: #{tpu_custom_call.1} parent=47 // pred_fallthru
          _
      $region48: #{tpu_custom_call.1} parent=5 // pred_fallthru
        _
      %p1606 = scmp.le.s32.totalorder 2, %s28
      // Predicated region
      $region84: #{tpu_custom_call.1} parent=5 // pred_check
        %p1607 = pneg %p1606
      $region85: #{tpu_custom_call.1} parent=5 // pred_check_branch
        %1609 = sbr.rel (%p1607) target = $region87
      $region86: #{tpu_custom_call.1} parent=5 // pred_region
        %s1610 = ssub.s32 %s28, 2
        // Predicated region
        $region88: #{tpu_custom_call.1} parent=86 // pred_check
          %p1611 = pneg %p219
        $region89: #{tpu_custom_call.1} parent=86 // pred_check_branch
          %1613 = sbr.rel (%p1611) target = $region91
        $region90: #{tpu_custom_call.1} parent=86 // pred_region
          %s1614 = sand.u32 %s204, 1
          %s1615 = scalar_lea.sflag [#allocation4], %s1614
          %s1616 = sand.u32 %s204, 1
          %s1617 = smul.addr %s1616, 8
          %s1618 = scalar_lea.vmem [#allocation11], %s1617
          %1619 = dma.done %s1615, 128
        $region91: #{tpu_custom_call.1} parent=86 // pred_fallthru
          _
        // Predicated region
        $region92: #{tpu_custom_call.1} parent=86 // pred_check
          %p1620 = pneg %p245
        $region93: #{tpu_custom_call.1} parent=86 // pred_check_branch
          %1622 = sbr.rel (%p1620) target = $region95
        $region94: #{tpu_custom_call.1} parent=86 // pred_region
          %s1623 = sand.u32 %s230, 1
          %s1624 = scalar_lea.sflag [#allocation13], %s1623
          %s1625 = sand.u32 %s230, 1
          %s1626 = smul.addr %s1625, 8
          %s1627 = scalar_lea.vmem [#allocation12], %s1626
          %1628 = dma.done %s1624, 128
        $region95: #{tpu_custom_call.1} parent=86 // pred_fallthru
          _
      $region87: #{tpu_custom_call.1} parent=5 // pred_fallthru
        _
    $region6: #{tpu_custom_call.1} parent=1 // loop_footer
      %s32 = sadd.s32 1, %s28
    $region7: #{tpu_custom_call.1} parent=1 // loop_footer_branch
      %27 = sbr.rel target = $region3
    $region8: #{tpu_custom_call.1} parent=1 // loop_exit
      _
    %1629 = vsyncpa [#allocation3], 1
    %s1630 = scalar_lea.sflag [#allocation3], 1
    %1631 = vsyncpa %s1630, 1
    %1632 = vsyncpa [#allocation6], 1
    %s1633 = scalar_lea.sflag [#allocation6], 1
    %1634 = vsyncpa %s1633, 1
    %1635 = vsyncpa [#allocation9], 1
    %1636 = vsyncpa [#allocation4], 1
    %s1637 = scalar_lea.sflag [#allocation4], 1
    %1638 = vsyncpa %s1637, 1
    %1639 = vsyncpa [#allocation13], 1
    %s1640 = scalar_lea.sflag [#allocation13], 1
    %1641 = vsyncpa %s1640, 1

</llo_original>
